<compile_context>
chip_gen: v7x
topology: tpu7x:2x2x1
jax: 0.10.0
libtpu: 0.0.40
codegen_flags: <defaults>
</compile_context>

<pallas_src>
import functools

import jax
import jax.numpy as jnp
from jax.experimental import pallas as pl
from jax.experimental.pallas import tpu as pltpu

ROW_TILE = 256    # max node/edge-row tile for the MLPs and scatter output
EDGE_TILE = 512   # max edge tile for the scatter-add reduction axis


def _round_up(n, m):
    return ((n + m - 1) // m) * m


def _row_tile(n, max_tile):
    # Full (8-aligned) rows when small -> single grid step, no waste;
    # max_tile (multiple of 8/16) when large -> several grid steps, which also
    # lets the "parallel" axis shard across v7x's two TensorCores.
    return min(max_tile, _round_up(max(n, 1), 8))


def _pad_rows(x, n_pad, fill=0):
    n = x.shape[0]
    if n_pad == n:
        return x
    pad_block = jnp.full((n_pad - n,) + x.shape[1:], fill, x.dtype)
    return jnp.concatenate([x, pad_block], axis=0)


# ---------------------------------------------------------------------------
# Pallas kernels
# ---------------------------------------------------------------------------
def mlp3_kernel(x_ref, w1_ref, b1_ref, w2_ref, b2_ref, w3_ref, b3_ref, o_ref):
    # bf16 MXU operands, f32 accumulation; bias/ReLU kept in f32 (v5e-safe).
    h = jnp.dot(x_ref[...], w1_ref[...], preferred_element_type=jnp.float32)
    h = jnp.maximum(h + b1_ref[...], 0.0)
    h = jnp.dot(h.astype(jnp.bfloat16), w2_ref[...],
                preferred_element_type=jnp.float32)
    h = jnp.maximum(h + b2_ref[...], 0.0)
    o_ref[...] = jnp.dot(h.astype(jnp.bfloat16), w3_ref[...],
                         preferred_element_type=jnp.float32) + b3_ref[...]


def scatter_add_kernel(tgt_ref, msg_ref, o_ref, acc_ref):
    # Grid: (node tiles [parallel], edge tiles [arbitrary, last]).
    # tgt_ref: (1, ET) int32 target node id per edge (-1 for padding edges)
    # msg_ref: (ET, D) bf16 edge messages (zero-filled padding rows)
    # o_ref  : (TN, D) f32 aggregated messages for this tile of nodes
    # acc_ref: (TN, D) f32 VMEM accumulator, resident across the edge axis
    @pl.when(pl.program_id(1) == 0)
    def _():
        acc_ref[...] = jnp.zeros_like(acc_ref)

    tn = o_ref.shape[0]
    et = msg_ref.shape[0]
    row0 = pl.program_id(0) * tn
    node_ids = jax.lax.broadcasted_iota(jnp.int32, (tn, et), 0) + row0
    mask = (node_ids == tgt_ref[...]).astype(jnp.bfloat16)   # exact in bf16
    acc_ref[...] += jnp.dot(mask, msg_ref[...],
                            preferred_element_type=jnp.float32)

    @pl.when(pl.program_id(1) == pl.num_programs(1) - 1)
    def _():
        o_ref[...] = acc_ref[...]


# ---------------------------------------------------------------------------
# Wrappers
# ---------------------------------------------------------------------------
def mlp3(x, params):
    """Fused 3-layer MLP (matches torch MLP(layers=3): Lin-ReLU-Lin-ReLU-Lin)."""
    (w1, b1), (w2, b2), (w3, b3) = params
    n, din = x.shape
    hidden = w1.shape[1]
    dout = w3.shape[1]

    # Lane-dense output slab: zero-pad last layer to a multiple of 128 output
    # columns (numerically exact), slice back after the call.
    dout_pad = _round_up(dout, 128)
    if dout_pad != dout:
        w3 = jnp.pad(w3, ((0, 0), (0, dout_pad - dout)))
        b3 = jnp.pad(b3, (0, dout_pad - dout))

    tn = _row_tile(n, ROW_TILE)
    n_pad = _round_up(n, tn)
    xp = _pad_rows(x.astype(jnp.bfloat16), n_pad)

    w1b, w2b, w3b = (w.astype(jnp.bfloat16) for w in (w1, w2, w3))
    b1f, b2f, b3f = (b.astype(jnp.float32).reshape(1, -1) for b in (b1, b2, b3))

    out = pl.pallas_call(
        mlp3_kernel,
        out_shape=jax.ShapeDtypeStruct((n_pad, dout_pad), jnp.float32),
        grid=(n_pad // tn,),
        in_specs=[
            pl.BlockSpec((tn, din), lambda i: (i, 0)),
            pl.BlockSpec((din, hidden), lambda i: (0, 0)),
            pl.BlockSpec((1, hidden), lambda i: (0, 0)),
            pl.BlockSpec((hidden, hidden), lambda i: (0, 0)),
            pl.BlockSpec((1, hidden), lambda i: (0, 0)),
            pl.BlockSpec((hidden, dout_pad), lambda i: (0, 0)),
            pl.BlockSpec((1, dout_pad), lambda i: (0, 0)),
        ],
        out_specs=pl.BlockSpec((tn, dout_pad), lambda i: (i, 0)),
        compiler_params=pltpu.CompilerParams(dimension_semantics=("parallel",)),
    )(xp, w1b, b1f, w2b, b2f, w3b, b3f)
    return out[:n, :dout]


def scatter_add(messages, targets, num_nodes):
    """aggr='add' of PyG MessagePassing: sum messages into target nodes."""
    e, d = messages.shape

    et = min(EDGE_TILE, _round_up(max(e, 1), 16))
    e_pad = _round_up(e, et)
    msg_p = _pad_rows(messages.astype(jnp.bfloat16), e_pad)           # zero-fill
    tgt_p = _pad_rows(targets.astype(jnp.int32), e_pad, fill=-1).reshape(1, -1)

    tn = _row_tile(num_nodes, ROW_TILE)
    n_pad = _round_up(num_nodes, tn)

    # TODO(synk): for very large graphs, replace the dense one-hot matmul with
    # a sorted segment-sum kernel (pre-sort edges by dst + scalar-prefetched
    # per-tile offsets); the one-hot form scales as O(N*E*D).
    out = pl.pallas_call(
        scatter_add_kernel,
        out_shape=jax.ShapeDtypeStruct((n_pad, d), jnp.float32),
        grid=(n_pad // tn, e_pad // et),
        in_specs=[
            pl.BlockSpec((1, et), lambda i, j: (0, j)),
            pl.BlockSpec((et, d), lambda i, j: (j, 0)),
        ],
        out_specs=pl.BlockSpec((tn, d), lambda i, j: (i, 0)),
        scratch_shapes=[pltpu.VMEM((tn, d), jnp.float32)],
        compiler_params=pltpu.CompilerParams(
            dimension_semantics=("parallel", "arbitrary")),
    )(tgt_p, msg_p)
    return out[:num_nodes]


# ---------------------------------------------------------------------------
# Parameter construction (deterministic, matches torch MLP.reset_parameters:
# weight ~ N(0, 1/sqrt(in_features)), bias = 0)
# ---------------------------------------------------------------------------
def init_mlp(key, din, hidden, dout):
    k1, k2, k3 = jax.random.split(key, 3)
    w1 = jax.random.normal(k1, (din, hidden), jnp.float32) / jnp.sqrt(float(din))
    w2 = jax.random.normal(k2, (hidden, hidden), jnp.float32) / jnp.sqrt(float(hidden))
    w3 = jax.random.normal(k3, (hidden, dout), jnp.float32) / jnp.sqrt(float(hidden))
    return (
        (w1, jnp.zeros((hidden,), jnp.float32)),
        (w2, jnp.zeros((hidden,), jnp.float32)),
        (w3, jnp.zeros((dout,), jnp.float32)),
    )


def init_resnet_gnn(key, cfg):
    emb = cfg["embedding"]
    hid = cfg["hidden_size"]
    n_tracks = cfg["n_tracks"]
    keys = jax.random.split(key, 3 + 2 * cfg["n_mp_layers"])
    params = {
        # self.a = ones((3, n_tracks+1, 3)) in the torch module
        "a": jnp.ones((3, n_tracks + 1, 3), jnp.float32),
        "embedding_node": init_mlp(keys[0], 5 + 3, emb, emb),
        "embedding_edges": init_mlp(keys[1], 5, emb, emb),
        "node_out": init_mlp(keys[2], emb, hid, 1),
        "layers": [],
    }
    for i in range(cfg["n_mp_layers"]):
        params["layers"].append({
            "lin_edge": init_mlp(keys[3 + 2 * i], 3 * emb, 3 * emb, emb),
            "lin_node": init_mlp(keys[4 + 2 * i], 2 * emb, 2 * emb, emb),
        })
    return params


# ---------------------------------------------------------------------------
# Forward pass (ResNetGNN with embedding > 0, h == 0)
# ---------------------------------------------------------------------------
def resnet_gnn_forward(params, x_data, edge_index, edge_attr, data_id):
    N = x_data.shape[0]
    src = edge_index[0]  # x_j (source)
    dst = edge_index[1]  # x_i (target); aggregation index

    # node_feature = cat(x[:,2:4], x[:,6:8], x[:,4:5])  -> (x, y, vx, vy, erk)
    node_feature = jnp.concatenate(
        [x_data[:, 2:4], x_data[:, 6:8], x_data[:, 4:5]], axis=-1
    ).astype(jnp.float32)
    # TODO(synk): torch adds randn*noise_level here; noise_level=0 in this
    # deterministic setup so no noise is added.

    # EdgeNetwork.message: new_edges = cat(d, dx, dy, dvx, dvy)
    xi = node_feature[dst]
    xj = node_feature[src]
    d = edge_attr[:, 0:1].astype(jnp.float32)
    diff = xj[:, 0:4] - xi[:, 0:4]  # (dx, dy, dvx, dvy)
    edge_feature = jnp.concatenate([d, diff], axis=-1)  # [E, 5]

    # embedding path
    track_ids = x_data[:, 1].astype(jnp.int32)
    cell_embedding = params["a"][data_id, track_ids, :]  # [N, 3]
    node_feature = mlp3(
        jnp.concatenate([node_feature, cell_embedding], axis=-1),
        params["embedding_node"],
    )  # [N, emb]
    edge_feature = mlp3(edge_feature, params["embedding_edges"])  # [E, emb]

    # InteractionNetworkEmb message-passing layers (h == 0 branch)
    # TODO(synk): the x[src]/x[dst] gathers + 3*emb concat are still JAX glue;
    # fusing them into lin_edge via scalar-prefetched indices is a further
    # HBM-traffic optimization not implemented here.
    for lp in params["layers"]:
        x_i = node_feature[dst]
        x_j = node_feature[src]
        edge_in = jnp.concatenate([edge_feature, x_i, x_j], axis=-1)  # [E, 3*emb]
        new_edges = mlp3(edge_in, lp["lin_edge"])                     # [E, emb]
        aggr = scatter_add(new_edges, dst, N)                         # [N, emb]
        node_upd = mlp3(
            jnp.concatenate([node_feature, aggr], axis=-1), lp["lin_node"]
        )
        node_feature = node_feature + node_upd
        edge_feature = edge_feature + new_edges

    # TODO(synk): h != 0 GRUCell path and embedding==0 (msg-variant) path of the
    # torch module are not exercised by this config and are not implemented.
    pred = mlp3(node_feature, params["node_out"])  # [N, 1]
    return pred


# ---------------------------------------------------------------------------
if __name__ == "__main__":
    cfg = dict(
        embedding=32,
        hidden_size=32,
        n_mp_layers=2,
        n_tracks=7,
        noise_level=0.0,
        h=0,
    )

    key = jax.random.PRNGKey(0)
    k_params, k_x, k_tid, k_edge, k_attr = jax.random.split(key, 5)

    N, E = 8, 16
    params = init_resnet_gnn(k_params, cfg)

    # data.x : [N, 8]; column 1 holds the integer track id.
    x_data = jax.random.normal(k_x, (N, 8), jnp.float32)
    track_ids = jax.random.randint(k_tid, (N,), 0, cfg["n_tracks"] + 1)
    x_data = x_data.at[:, 1].set(track_ids.astype(jnp.float32))

    # edge_index : [2, E] (row 0 = source j, row 1 = target i)
    edge_index = jax.random.randint(k_edge, (2, E), 0, N, dtype=jnp.int32)
    # data.edge_attr : [E, 2] (only column 0 is used by EdgeNetwork)
    edge_attr = jax.random.normal(k_attr, (E, 2), jnp.float32)

    data_id = 0

    fwd = jax.jit(functools.partial(resnet_gnn_forward, params))
    pred = fwd(x_data, edge_index, edge_attr, data_id)
    pred = jax.block_until_ready(pred)

    assert pred.shape == (N, 1), pred.shape
    assert bool(jnp.all(jnp.isfinite(pred)))
    print("KERNEL_OK")
</pallas_src>

<mosaic_0001>
module attributes {stable_mosaic.version = 11 : i64} {
  func.func @mlp3_kernel(%arg0: i32, %arg1: memref<16x96xbf16, #tpu.memory_space<vmem>>, %arg2: memref<96x96xbf16, #tpu.memory_space<vmem>>, %arg3: memref<1x96xf32, #tpu.memory_space<vmem>>, %arg4: memref<96x96xbf16, #tpu.memory_space<vmem>>, %arg5: memref<1x96xf32, #tpu.memory_space<vmem>>, %arg6: memref<96x128xbf16, #tpu.memory_space<vmem>>, %arg7: memref<1x128xf32, #tpu.memory_space<vmem>>, %arg8: memref<16x128xf32, #tpu.memory_space<vmem>>) attributes {dimension_semantics = [#tpu.dimension_semantics<parallel>], iteration_bounds = array<i64: 1>, scalar_prefetch = 0 : i64, scratch_operands = 0 : i64, tpu.core_type = #tpu.core_type<tc>, window_params = [{transform_indices = @transform_0, window_bounds = array<i64: 16, 96>}, {pipeline_mode = #tpu.pipeline_mode<synchronous>, transform_indices = @transform_1, window_bounds = array<i64: 96, 96>}, {pipeline_mode = #tpu.pipeline_mode<synchronous>, transform_indices = @transform_2, window_bounds = array<i64: 1, 96>}, {pipeline_mode = #tpu.pipeline_mode<synchronous>, transform_indices = @transform_3, window_bounds = array<i64: 96, 96>}, {pipeline_mode = #tpu.pipeline_mode<synchronous>, transform_indices = @transform_4, window_bounds = array<i64: 1, 96>}, {pipeline_mode = #tpu.pipeline_mode<synchronous>, transform_indices = @transform_5, window_bounds = array<i64: 96, 128>}, {pipeline_mode = #tpu.pipeline_mode<synchronous>, transform_indices = @transform_6, window_bounds = array<i64: 1, 128>}, {transform_indices = @transform_7, window_bounds = array<i64: 16, 128>}]} {
    %c0 = arith.constant 0 : index
    %c0_0 = arith.constant 0 : index
    %0 = vector.load %arg1[%c0, %c0_0] : memref<16x96xbf16, #tpu.memory_space<vmem>>, vector<16x96xbf16>
    %c0_1 = arith.constant 0 : index
    %c0_2 = arith.constant 0 : index
    %1 = vector.load %arg2[%c0_1, %c0_2] : memref<96x96xbf16, #tpu.memory_space<vmem>>, vector<96x96xbf16>
    %cst = arith.constant dense<0.000000e+00> : vector<16x96xf32>
    %2 = tpu.matmul %0, %1, %cst {dimension_numbers = #tpu.dot_dimension_numbers<[1], [0], [0], [1], [0, 0, 1, 1], [], []>} : vector<16x96xbf16>, vector<96x96xbf16>, vector<16x96xf32> -> vector<16x96xf32>
    %c0_3 = arith.constant 0 : index
    %c0_4 = arith.constant 0 : index
    %3 = vector.load %arg3[%c0_3, %c0_4] : memref<1x96xf32, #tpu.memory_space<vmem>>, vector<1x96xf32>
    %4 = vector.broadcast %3 : vector<1x96xf32> to vector<16x96xf32>
    %5 = arith.addf %2, %4 : vector<16x96xf32>
    %cst_5 = arith.constant 0.000000e+00 : f32
    %6 = vector.broadcast %cst_5 : f32 to vector<16x96xf32>
    %7 = arith.maximumf %5, %6 : vector<16x96xf32>
    %8 = arith.truncf %7 : vector<16x96xf32> to vector<16x96xbf16>
    %c0_6 = arith.constant 0 : index
    %c0_7 = arith.constant 0 : index
    %9 = vector.load %arg4[%c0_6, %c0_7] : memref<96x96xbf16, #tpu.memory_space<vmem>>, vector<96x96xbf16>
    %cst_8 = arith.constant dense<0.000000e+00> : vector<16x96xf32>
    %10 = tpu.matmul %8, %9, %cst_8 {dimension_numbers = #tpu.dot_dimension_numbers<[1], [0], [0], [1], [0, 0, 1, 1], [], []>} : vector<16x96xbf16>, vector<96x96xbf16>, vector<16x96xf32> -> vector<16x96xf32>
    %c0_9 = arith.constant 0 : index
    %c0_10 = arith.constant 0 : index
    %11 = vector.load %arg5[%c0_9, %c0_10] : memref<1x96xf32, #tpu.memory_space<vmem>>, vector<1x96xf32>
    %12 = vector.broadcast %11 : vector<1x96xf32> to vector<16x96xf32>
    %13 = arith.addf %10, %12 : vector<16x96xf32>
    %cst_11 = arith.constant 0.000000e+00 : f32
    %14 = vector.broadcast %cst_11 : f32 to vector<16x96xf32>
    %15 = arith.maximumf %13, %14 : vector<16x96xf32>
    %16 = arith.truncf %15 : vector<16x96xf32> to vector<16x96xbf16>
    %c0_12 = arith.constant 0 : index
    %c0_13 = arith.constant 0 : index
    %17 = vector.load %arg6[%c0_12, %c0_13] : memref<96x128xbf16, #tpu.memory_space<vmem>>, vector<96x128xbf16>
    %cst_14 = arith.constant dense<0.000000e+00> : vector<16x128xf32>
    %18 = tpu.matmul %16, %17, %cst_14 {dimension_numbers = #tpu.dot_dimension_numbers<[1], [0], [0], [1], [0, 0, 1, 1], [], []>} : vector<16x96xbf16>, vector<96x128xbf16>, vector<16x128xf32> -> vector<16x128xf32>
    %c0_15 = arith.constant 0 : index
    %c0_16 = arith.constant 0 : index
    %19 = vector.load %arg7[%c0_15, %c0_16] : memref<1x128xf32, #tpu.memory_space<vmem>>, vector<1x128xf32>
    %20 = vector.broadcast %19 : vector<1x128xf32> to vector<16x128xf32>
    %21 = arith.addf %18, %20 : vector<16x128xf32>
    %c0_17 = arith.constant 0 : index
    %c0_18 = arith.constant 0 : index
    %22 = vector.load %arg8[%c0_17, %c0_18] : memref<16x128xf32, #tpu.memory_space<vmem>>, vector<16x128xf32>
    tpu.vector_store %arg8[%c0_17, %c0_18], %21 {strides = array<i32>} : memref<16x128xf32, #tpu.memory_space<vmem>>, vector<16x128xf32>,
    return
  }
  func.func @transform_0(%arg0: i32) -> (i32, i32) {
    %c0_i32 = arith.constant 0 : i32
    %c0_i32_0 = arith.constant 0 : i32
    return %arg0, %c0_i32 : i32, i32
  }
  func.func @transform_1(%arg0: i32) -> (i32, i32) {
    %c0_i32 = arith.constant 0 : i32
    %c0_i32_0 = arith.constant 0 : i32
    %c0_i32_1 = arith.constant 0 : i32
    return %c0_i32, %c0_i32_0 : i32, i32
  }
  func.func @transform_2(%arg0: i32) -> (i32, i32) {
    %c0_i32 = arith.constant 0 : i32
    %c0_i32_0 = arith.constant 0 : i32
    %c0_i32_1 = arith.constant 0 : i32
    return %c0_i32, %c0_i32_0 : i32, i32
  }
  func.func @transform_3(%arg0: i32) -> (i32, i32) {
    %c0_i32 = arith.constant 0 : i32
    %c0_i32_0 = arith.constant 0 : i32
    %c0_i32_1 = arith.constant 0 : i32
    return %c0_i32, %c0_i32_0 : i32, i32
  }
  func.func @transform_4(%arg0: i32) -> (i32, i32) {
    %c0_i32 = arith.constant 0 : i32
    %c0_i32_0 = arith.constant 0 : i32
    %c0_i32_1 = arith.constant 0 : i32
    return %c0_i32, %c0_i32_0 : i32, i32
  }
  func.func @transform_5(%arg0: i32) -> (i32, i32) {
    %c0_i32 = arith.constant 0 : i32
    %c0_i32_0 = arith.constant 0 : i32
    %c0_i32_1 = arith.constant 0 : i32
    return %c0_i32, %c0_i32_0 : i32, i32
  }
  func.func @transform_6(%arg0: i32) -> (i32, i32) {
    %c0_i32 = arith.constant 0 : i32
    %c0_i32_0 = arith.constant 0 : i32
    %c0_i32_1 = arith.constant 0 : i32
    return %c0_i32, %c0_i32_0 : i32, i32
  }
  func.func @transform_7(%arg0: i32) -> (i32, i32) {
    %c0_i32 = arith.constant 0 : i32
    %c0_i32_0 = arith.constant 0 : i32
    return %arg0, %c0_i32 : i32, i32
  }
}

module attributes {stable_mosaic.version = 11 : i64} {
  func.func @mlp3_kernel(%arg0: i32, %arg1: memref<16x5xbf16, #tpu.memory_space<vmem>>, %arg2: memref<5x32xbf16, #tpu.memory_space<vmem>>, %arg3: memref<1x32xf32, #tpu.memory_space<vmem>>, %arg4: memref<32x32xbf16, #tpu.memory_space<vmem>>, %arg5: memref<1x32xf32, #tpu.memory_space<vmem>>, %arg6: memref<32x128xbf16, #tpu.memory_space<vmem>>, %arg7: memref<1x128xf32, #tpu.memory_space<vmem>>, %arg8: memref<16x128xf32, #tpu.memory_space<vmem>>) attributes {dimension_semantics = [#tpu.dimension_semantics<parallel>], iteration_bounds = array<i64: 1>, scalar_prefetch = 0 : i64, scratch_operands = 0 : i64, tpu.core_type = #tpu.core_type<tc>, window_params = [{transform_indices = @transform_0, window_bounds = array<i64: 16, 5>}, {pipeline_mode = #tpu.pipeline_mode<synchronous>, transform_indices = @transform_1, window_bounds = array<i64: 5, 32>}, {pipeline_mode = #tpu.pipeline_mode<synchronous>, transform_indices = @transform_2, window_bounds = array<i64: 1, 32>}, {pipeline_mode = #tpu.pipeline_mode<synchronous>, transform_indices = @transform_3, window_bounds = array<i64: 32, 32>}, {pipeline_mode = #tpu.pipeline_mode<synchronous>, transform_indices = @transform_4, window_bounds = array<i64: 1, 32>}, {pipeline_mode = #tpu.pipeline_mode<synchronous>, transform_indices = @transform_5, window_bounds = array<i64: 32, 128>}, {pipeline_mode = #tpu.pipeline_mode<synchronous>, transform_indices = @transform_6, window_bounds = array<i64: 1, 128>}, {transform_indices = @transform_7, window_bounds = array<i64: 16, 128>}]} {
    %c0 = arith.constant 0 : index
    %c0_0 = arith.constant 0 : index
    %0 = vector.load %arg1[%c0, %c0_0] : memref<16x5xbf16, #tpu.memory_space<vmem>>, vector<16x5xbf16>
    %c0_1 = arith.constant 0 : index
    %c0_2 = arith.constant 0 : index
    %1 = vector.load %arg2[%c0_1, %c0_2] : memref<5x32xbf16, #tpu.memory_space<vmem>>, vector<5x32xbf16>
    %cst = arith.constant dense<0.000000e+00> : vector<16x32xf32>
    %2 = tpu.matmul %0, %1, %cst {dimension_numbers = #tpu.dot_dimension_numbers<[1], [0], [0], [1], [0, 0, 1, 1], [], []>} : vector<16x5xbf16>, vector<5x32xbf16>, vector<16x32xf32> -> vector<16x32xf32>
    %c0_3 = arith.constant 0 : index
    %c0_4 = arith.constant 0 : index
    %3 = vector.load %arg3[%c0_3, %c0_4] : memref<1x32xf32, #tpu.memory_space<vmem>>, vector<1x32xf32>
    %4 = vector.broadcast %3 : vector<1x32xf32> to vector<16x32xf32>
    %5 = arith.addf %2, %4 : vector<16x32xf32>
    %cst_5 = arith.constant 0.000000e+00 : f32
    %6 = vector.broadcast %cst_5 : f32 to vector<16x32xf32>
    %7 = arith.maximumf %5, %6 : vector<16x32xf32>
    %8 = arith.truncf %7 : vector<16x32xf32> to vector<16x32xbf16>
    %c0_6 = arith.constant 0 : index
    %c0_7 = arith.constant 0 : index
    %9 = vector.load %arg4[%c0_6, %c0_7] : memref<32x32xbf16, #tpu.memory_space<vmem>>, vector<32x32xbf16>
    %cst_8 = arith.constant dense<0.000000e+00> : vector<16x32xf32>
    %10 = tpu.matmul %8, %9, %cst_8 {dimension_numbers = #tpu.dot_dimension_numbers<[1], [0], [0], [1], [0, 0, 1, 1], [], []>} : vector<16x32xbf16>, vector<32x32xbf16>, vector<16x32xf32> -> vector<16x32xf32>
    %c0_9 = arith.constant 0 : index
    %c0_10 = arith.constant 0 : index
    %11 = vector.load %arg5[%c0_9, %c0_10] : memref<1x32xf32, #tpu.memory_space<vmem>>, vector<1x32xf32>
    %12 = vector.broadcast %11 : vector<1x32xf32> to vector<16x32xf32>
    %13 = arith.addf %10, %12 : vector<16x32xf32>
    %cst_11 = arith.constant 0.000000e+00 : f32
    %14 = vector.broadcast %cst_11 : f32 to vector<16x32xf32>
    %15 = arith.maximumf %13, %14 : vector<16x32xf32>
    %16 = arith.truncf %15 : vector<16x32xf32> to vector<16x32xbf16>
    %c0_12 = arith.constant 0 : index
    %c0_13 = arith.constant 0 : index
    %17 = vector.load %arg6[%c0_12, %c0_13] : memref<32x128xbf16, #tpu.memory_space<vmem>>, vector<32x128xbf16>
    %cst_14 = arith.constant dense<0.000000e+00> : vector<16x128xf32>
    %18 = tpu.matmul %16, %17, %cst_14 {dimension_numbers = #tpu.dot_dimension_numbers<[1], [0], [0], [1], [0, 0, 1, 1], [], []>} : vector<16x32xbf16>, vector<32x128xbf16>, vector<16x128xf32> -> vector<16x128xf32>
    %c0_15 = arith.constant 0 : index
    %c0_16 = arith.constant 0 : index
    %19 = vector.load %arg7[%c0_15, %c0_16] : memref<1x128xf32, #tpu.memory_space<vmem>>, vector<1x128xf32>
    %20 = vector.broadcast %19 : vector<1x128xf32> to vector<16x128xf32>
    %21 = arith.addf %18, %20 : vector<16x128xf32>
    %c0_17 = arith.constant 0 : index
    %c0_18 = arith.constant 0 : index
    %22 = vector.load %arg8[%c0_17, %c0_18] : memref<16x128xf32, #tpu.memory_space<vmem>>, vector<16x128xf32>
    tpu.vector_store %arg8[%c0_17, %c0_18], %21 {strides = array<i32>} : memref<16x128xf32, #tpu.memory_space<vmem>>, vector<16x128xf32>,
    return
  }
  func.func @transform_0(%arg0: i32) -> (i32, i32) {
    %c0_i32 = arith.constant 0 : i32
    %c0_i32_0 = arith.constant 0 : i32
    return %arg0, %c0_i32 : i32, i32
  }
  func.func @transform_1(%arg0: i32) -> (i32, i32) {
    %c0_i32 = arith.constant 0 : i32
    %c0_i32_0 = arith.constant 0 : i32
    %c0_i32_1 = arith.constant 0 : i32
    return %c0_i32, %c0_i32_0 : i32, i32
  }
  func.func @transform_2(%arg0: i32) -> (i32, i32) {
    %c0_i32 = arith.constant 0 : i32
    %c0_i32_0 = arith.constant 0 : i32
    %c0_i32_1 = arith.constant 0 : i32
    return %c0_i32, %c0_i32_0 : i32, i32
  }
  func.func @transform_3(%arg0: i32) -> (i32, i32) {
    %c0_i32 = arith.constant 0 : i32
    %c0_i32_0 = arith.constant 0 : i32
    %c0_i32_1 = arith.constant 0 : i32
    return %c0_i32, %c0_i32_0 : i32, i32
  }
  func.func @transform_4(%arg0: i32) -> (i32, i32) {
    %c0_i32 = arith.constant 0 : i32
    %c0_i32_0 = arith.constant 0 : i32
    %c0_i32_1 = arith.constant 0 : i32
    return %c0_i32, %c0_i32_0 : i32, i32
  }
  func.func @transform_5(%arg0: i32) -> (i32, i32) {
    %c0_i32 = arith.constant 0 : i32
    %c0_i32_0 = arith.constant 0 : i32
    %c0_i32_1 = arith.constant 0 : i32
    return %c0_i32, %c0_i32_0 : i32, i32
  }
  func.func @transform_6(%arg0: i32) -> (i32, i32) {
    %c0_i32 = arith.constant 0 : i32
    %c0_i32_0 = arith.constant 0 : i32
    %c0_i32_1 = arith.constant 0 : i32
    return %c0_i32, %c0_i32_0 : i32, i32
  }
  func.func @transform_7(%arg0: i32) -> (i32, i32) {
    %c0_i32 = arith.constant 0 : i32
    %c0_i32_0 = arith.constant 0 : i32
    return %arg0, %c0_i32 : i32, i32
  }
}

module attributes {stable_mosaic.version = 11 : i64} {
  func.func @mlp3_kernel(%arg0: i32, %arg1: memref<8x8xbf16, #tpu.memory_space<vmem>>, %arg2: memref<8x32xbf16, #tpu.memory_space<vmem>>, %arg3: memref<1x32xf32, #tpu.memory_space<vmem>>, %arg4: memref<32x32xbf16, #tpu.memory_space<vmem>>, %arg5: memref<1x32xf32, #tpu.memory_space<vmem>>, %arg6: memref<32x128xbf16, #tpu.memory_space<vmem>>, %arg7: memref<1x128xf32, #tpu.memory_space<vmem>>, %arg8: memref<8x128xf32, #tpu.memory_space<vmem>>) attributes {dimension_semantics = [#tpu.dimension_semantics<parallel>], iteration_bounds = array<i64: 1>, scalar_prefetch = 0 : i64, scratch_operands = 0 : i64, tpu.core_type = #tpu.core_type<tc>, window_params = [{transform_indices = @transform_0, window_bounds = array<i64: 8, 8>}, {pipeline_mode = #tpu.pipeline_mode<synchronous>, transform_indices = @transform_1, window_bounds = array<i64: 8, 32>}, {pipeline_mode = #tpu.pipeline_mode<synchronous>, transform_indices = @transform_2, window_bounds = array<i64: 1, 32>}, {pipeline_mode = #tpu.pipeline_mode<synchronous>, transform_indices = @transform_3, window_bounds = array<i64: 32, 32>}, {pipeline_mode = #tpu.pipeline_mode<synchronous>, transform_indices = @transform_4, window_bounds = array<i64: 1, 32>}, {pipeline_mode = #tpu.pipeline_mode<synchronous>, transform_indices = @transform_5, window_bounds = array<i64: 32, 128>}, {pipeline_mode = #tpu.pipeline_mode<synchronous>, transform_indices = @transform_6, window_bounds = array<i64: 1, 128>}, {transform_indices = @transform_7, window_bounds = array<i64: 8, 128>}]} {
    %c0 = arith.constant 0 : index
    %c0_0 = arith.constant 0 : index
    %0 = vector.load %arg1[%c0, %c0_0] : memref<8x8xbf16, #tpu.memory_space<vmem>>, vector<8x8xbf16>
    %c0_1 = arith.constant 0 : index
    %c0_2 = arith.constant 0 : index
    %1 = vector.load %arg2[%c0_1, %c0_2] : memref<8x32xbf16, #tpu.memory_space<vmem>>, vector<8x32xbf16>
    %cst = arith.constant dense<0.000000e+00> : vector<8x32xf32>
    %2 = tpu.matmul %0, %1, %cst {dimension_numbers = #tpu.dot_dimension_numbers<[1], [0], [0], [1], [0, 0, 1, 1], [], []>} : vector<8x8xbf16>, vector<8x32xbf16>, vector<8x32xf32> -> vector<8x32xf32>
    %c0_3 = arith.constant 0 : index
    %c0_4 = arith.constant 0 : index
    %3 = vector.load %arg3[%c0_3, %c0_4] : memref<1x32xf32, #tpu.memory_space<vmem>>, vector<1x32xf32>
    %4 = vector.broadcast %3 : vector<1x32xf32> to vector<8x32xf32>
    %5 = arith.addf %2, %4 : vector<8x32xf32>
    %cst_5 = arith.constant 0.000000e+00 : f32
    %6 = vector.broadcast %cst_5 : f32 to vector<8x32xf32>
    %7 = arith.maximumf %5, %6 : vector<8x32xf32>
    %8 = arith.truncf %7 : vector<8x32xf32> to vector<8x32xbf16>
    %c0_6 = arith.constant 0 : index
    %c0_7 = arith.constant 0 : index
    %9 = vector.load %arg4[%c0_6, %c0_7] : memref<32x32xbf16, #tpu.memory_space<vmem>>, vector<32x32xbf16>
    %cst_8 = arith.constant dense<0.000000e+00> : vector<8x32xf32>
    %10 = tpu.matmul %8, %9, %cst_8 {dimension_numbers = #tpu.dot_dimension_numbers<[1], [0], [0], [1], [0, 0, 1, 1], [], []>} : vector<8x32xbf16>, vector<32x32xbf16>, vector<8x32xf32> -> vector<8x32xf32>
    %c0_9 = arith.constant 0 : index
    %c0_10 = arith.constant 0 : index
    %11 = vector.load %arg5[%c0_9, %c0_10] : memref<1x32xf32, #tpu.memory_space<vmem>>, vector<1x32xf32>
    %12 = vector.broadcast %11 : vector<1x32xf32> to vector<8x32xf32>
    %13 = arith.addf %10, %12 : vector<8x32xf32>
    %cst_11 = arith.constant 0.000000e+00 : f32
    %14 = vector.broadcast %cst_11 : f32 to vector<8x32xf32>
    %15 = arith.maximumf %13, %14 : vector<8x32xf32>
    %16 = arith.truncf %15 : vector<8x32xf32> to vector<8x32xbf16>
    %c0_12 = arith.constant 0 : index
    %c0_13 = arith.constant 0 : index
    %17 = vector.load %arg6[%c0_12, %c0_13] : memref<32x128xbf16, #tpu.memory_space<vmem>>, vector<32x128xbf16>
    %cst_14 = arith.constant dense<0.000000e+00> : vector<8x128xf32>
    %18 = tpu.matmul %16, %17, %cst_14 {dimension_numbers = #tpu.dot_dimension_numbers<[1], [0], [0], [1], [0, 0, 1, 1], [], []>} : vector<8x32xbf16>, vector<32x128xbf16>, vector<8x128xf32> -> vector<8x128xf32>
    %c0_15 = arith.constant 0 : index
    %c0_16 = arith.constant 0 : index
    %19 = vector.load %arg7[%c0_15, %c0_16] : memref<1x128xf32, #tpu.memory_space<vmem>>, vector<1x128xf32>
    %20 = vector.broadcast %19 : vector<1x128xf32> to vector<8x128xf32>
    %21 = arith.addf %18, %20 : vector<8x128xf32>
    %c0_17 = arith.constant 0 : index
    %c0_18 = arith.constant 0 : index
    %22 = vector.load %arg8[%c0_17, %c0_18] : memref<8x128xf32, #tpu.memory_space<vmem>>, vector<8x128xf32>
    tpu.vector_store %arg8[%c0_17, %c0_18], %21 {strides = array<i32>} : memref<8x128xf32, #tpu.memory_space<vmem>>, vector<8x128xf32>,
    return
  }
  func.func @transform_0(%arg0: i32) -> (i32, i32) {
    %c0_i32 = arith.constant 0 : i32
    %c0_i32_0 = arith.constant 0 : i32
    return %arg0, %c0_i32 : i32, i32
  }
  func.func @transform_1(%arg0: i32) -> (i32, i32) {
    %c0_i32 = arith.constant 0 : i32
    %c0_i32_0 = arith.constant 0 : i32
    %c0_i32_1 = arith.constant 0 : i32
    return %c0_i32, %c0_i32_0 : i32, i32
  }
  func.func @transform_2(%arg0: i32) -> (i32, i32) {
    %c0_i32 = arith.constant 0 : i32
    %c0_i32_0 = arith.constant 0 : i32
    %c0_i32_1 = arith.constant 0 : i32
    return %c0_i32, %c0_i32_0 : i32, i32
  }
  func.func @transform_3(%arg0: i32) -> (i32, i32) {
    %c0_i32 = arith.constant 0 : i32
    %c0_i32_0 = arith.constant 0 : i32
    %c0_i32_1 = arith.constant 0 : i32
    return %c0_i32, %c0_i32_0 : i32, i32
  }
  func.func @transform_4(%arg0: i32) -> (i32, i32) {
    %c0_i32 = arith.constant 0 : i32
    %c0_i32_0 = arith.constant 0 : i32
    %c0_i32_1 = arith.constant 0 : i32
    return %c0_i32, %c0_i32_0 : i32, i32
  }
  func.func @transform_5(%arg0: i32) -> (i32, i32) {
    %c0_i32 = arith.constant 0 : i32
    %c0_i32_0 = arith.constant 0 : i32
    %c0_i32_1 = arith.constant 0 : i32
    return %c0_i32, %c0_i32_0 : i32, i32
  }
  func.func @transform_6(%arg0: i32) -> (i32, i32) {
    %c0_i32 = arith.constant 0 : i32
    %c0_i32_0 = arith.constant 0 : i32
    %c0_i32_1 = arith.constant 0 : i32
    return %c0_i32, %c0_i32_0 : i32, i32
  }
  func.func @transform_7(%arg0: i32) -> (i32, i32) {
    %c0_i32 = arith.constant 0 : i32
    %c0_i32_0 = arith.constant 0 : i32
    return %arg0, %c0_i32 : i32, i32
  }
}

module attributes {stable_mosaic.version = 11 : i64} {
  func.func @scatter_add_kernel(%arg0: i32, %arg1: i32, %arg2: memref<1x16xi32, #tpu.memory_space<vmem>>, %arg3: memref<16x32xbf16, #tpu.memory_space<vmem>>, %arg4: memref<8x32xf32, #tpu.memory_space<vmem>>, %arg5: memref<8x32xf32, #tpu.memory_space<vmem>>) attributes {dimension_semantics = [#tpu.dimension_semantics<parallel>, #tpu.dimension_semantics<arbitrary>], iteration_bounds = array<i64: 1, 1>, scalar_prefetch = 0 : i64, scratch_operands = 1 : i64, tpu.core_type = #tpu.core_type<tc>, window_params = [{transform_indices = @transform_0, window_bounds = array<i64: 1, 16>}, {transform_indices = @transform_1, window_bounds = array<i64: 16, 32>}, {transform_indices = @transform_2, window_bounds = array<i64: 8, 32>}]} {
    %c0_i32 = arith.constant 0 : i32
    %0 = arith.cmpi eq, %arg1, %c0_i32 : i32
    %1 = arith.extui %0 : i1 to i32
    %c0_i32_0 = arith.constant 0 : i32
    %2 = arith.cmpi ne, %1, %c0_i32_0 : i32
    scf.if %2 {
      %cst_10 = arith.constant 0.000000e+00 : f32
      %21 = vector.broadcast %cst_10 : f32 to vector<8x32xf32>
      %c0_11 = arith.constant 0 : index
      %c0_12 = arith.constant 0 : index
      %22 = vector.load %arg5[%c0_11, %c0_12] : memref<8x32xf32, #tpu.memory_space<vmem>>, vector<8x32xf32>
      tpu.vector_store %arg5[%c0_11, %c0_12], %21 {strides = array<i32>} : memref<8x32xf32, #tpu.memory_space<vmem>>, vector<8x32xf32>,
    } else {
    }
    %c8_i32 = arith.constant 8 : i32
    %3 = arith.muli %arg0, %c8_i32 : i32
    %4 = tpu.iota {dimensions = array<i32: 0>} : vector<8x16xi32>
    %5 = vector.broadcast %3 : i32 to vector<8x16xi32>
    %6 = arith.addi %4, %5 : vector<8x16xi32>
    %c0 = arith.constant 0 : index
    %c0_1 = arith.constant 0 : index
    %7 = vector.load %arg2[%c0, %c0_1] : memref<1x16xi32, #tpu.memory_space<vmem>>, vector<1x16xi32>
    %8 = vector.broadcast %7 : vector<1x16xi32> to vector<8x16xi32>
    %9 = arith.cmpi eq, %6, %8 : vector<8x16xi32>
    %10 = arith.extui %9 : vector<8x16xi1> to vector<8x16xi32>
    %11 = arith.sitofp %10 : vector<8x16xi32> to vector<8x16xf32>
    %12 = arith.truncf %11 : vector<8x16xf32> to vector<8x16xbf16>
    %c0_2 = arith.constant 0 : index
    %c0_3 = arith.constant 0 : index
    %13 = vector.load %arg5[%c0_2, %c0_3] : memref<8x32xf32, #tpu.memory_space<vmem>>, vector<8x32xf32>
    %c0_4 = arith.constant 0 : index
    %c0_5 = arith.constant 0 : index
    %14 = vector.load %arg3[%c0_4, %c0_5] : memref<16x32xbf16, #tpu.memory_space<vmem>>, vector<16x32xbf16>
    %cst = arith.constant dense<0.000000e+00> : vector<8x32xf32>
    %15 = tpu.matmul %12, %14, %cst {dimension_numbers = #tpu.dot_dimension_numbers<[1], [0], [0], [1], [0, 0, 1, 1], [], []>} : vector<8x16xbf16>, vector<16x32xbf16>, vector<8x32xf32> -> vector<8x32xf32>
    %16 = arith.addf %13, %15 : vector<8x32xf32>
    %c0_6 = arith.constant 0 : index
    %c0_7 = arith.constant 0 : index
    %17 = vector.load %arg5[%c0_6, %c0_7] : memref<8x32xf32, #tpu.memory_space<vmem>>, vector<8x32xf32>
    tpu.vector_store %arg5[%c0_6, %c0_7], %16 {strides = array<i32>} : memref<8x32xf32, #tpu.memory_space<vmem>>, vector<8x32xf32>,
    %c0_i32_8 = arith.constant 0 : i32
    %18 = arith.cmpi eq, %arg1, %c0_i32_8 : i32
    %19 = arith.extui %18 : i1 to i32
    %c0_i32_9 = arith.constant 0 : i32
    %20 = arith.cmpi ne, %19, %c0_i32_9 : i32
    scf.if %20 {
      %c0_10 = arith.constant 0 : index
      %c0_11 = arith.constant 0 : index
      %21 = vector.load %arg5[%c0_10, %c0_11] : memref<8x32xf32, #tpu.memory_space<vmem>>, vector<8x32xf32>
      %c0_12 = arith.constant 0 : index
      %c0_13 = arith.constant 0 : index
      %22 = vector.load %arg4[%c0_12, %c0_13] : memref<8x32xf32, #tpu.memory_space<vmem>>, vector<8x32xf32>
      tpu.vector_store %arg4[%c0_12, %c0_13], %21 {strides = array<i32>} : memref<8x32xf32, #tpu.memory_space<vmem>>, vector<8x32xf32>,
    } else {
    }
    return
  }
  func.func @transform_0(%arg0: i32, %arg1: i32) -> (i32, i32) {
    %c0_i32 = arith.constant 0 : i32
    %c0_i32_0 = arith.constant 0 : i32
    return %c0_i32, %arg1 : i32, i32
  }
  func.func @transform_1(%arg0: i32, %arg1: i32) -> (i32, i32) {
    %c0_i32 = arith.constant 0 : i32
    %c0_i32_0 = arith.constant 0 : i32
    return %arg1, %c0_i32 : i32, i32
  }
  func.func @transform_2(%arg0: i32, %arg1: i32) -> (i32, i32) {
    %c0_i32 = arith.constant 0 : i32
    %c0_i32_0 = arith.constant 0 : i32
    return %arg0, %c0_i32 : i32, i32
  }
}

module attributes {stable_mosaic.version = 11 : i64} {
  func.func @mlp3_kernel(%arg0: i32, %arg1: memref<8x64xbf16, #tpu.memory_space<vmem>>, %arg2: memref<64x64xbf16, #tpu.memory_space<vmem>>, %arg3: memref<1x64xf32, #tpu.memory_space<vmem>>, %arg4: memref<64x64xbf16, #tpu.memory_space<vmem>>, %arg5: memref<1x64xf32, #tpu.memory_space<vmem>>, %arg6: memref<64x128xbf16, #tpu.memory_space<vmem>>, %arg7: memref<1x128xf32, #tpu.memory_space<vmem>>, %arg8: memref<8x128xf32, #tpu.memory_space<vmem>>) attributes {dimension_semantics = [#tpu.dimension_semantics<parallel>], iteration_bounds = array<i64: 1>, scalar_prefetch = 0 : i64, scratch_operands = 0 : i64, tpu.core_type = #tpu.core_type<tc>, window_params = [{transform_indices = @transform_0, window_bounds = array<i64: 8, 64>}, {pipeline_mode = #tpu.pipeline_mode<synchronous>, transform_indices = @transform_1, window_bounds = array<i64: 64, 64>}, {pipeline_mode = #tpu.pipeline_mode<synchronous>, transform_indices = @transform_2, window_bounds = array<i64: 1, 64>}, {pipeline_mode = #tpu.pipeline_mode<synchronous>, transform_indices = @transform_3, window_bounds = array<i64: 64, 64>}, {pipeline_mode = #tpu.pipeline_mode<synchronous>, transform_indices = @transform_4, window_bounds = array<i64: 1, 64>}, {pipeline_mode = #tpu.pipeline_mode<synchronous>, transform_indices = @transform_5, window_bounds = array<i64: 64, 128>}, {pipeline_mode = #tpu.pipeline_mode<synchronous>, transform_indices = @transform_6, window_bounds = array<i64: 1, 128>}, {transform_indices = @transform_7, window_bounds = array<i64: 8, 128>}]} {
    %c0 = arith.constant 0 : index
    %c0_0 = arith.constant 0 : index
    %0 = vector.load %arg1[%c0, %c0_0] : memref<8x64xbf16, #tpu.memory_space<vmem>>, vector<8x64xbf16>
    %c0_1 = arith.constant 0 : index
    %c0_2 = arith.constant 0 : index
    %1 = vector.load %arg2[%c0_1, %c0_2] : memref<64x64xbf16, #tpu.memory_space<vmem>>, vector<64x64xbf16>
    %cst = arith.constant dense<0.000000e+00> : vector<8x64xf32>
    %2 = tpu.matmul %0, %1, %cst {dimension_numbers = #tpu.dot_dimension_numbers<[1], [0], [0], [1], [0, 0, 1, 1], [], []>} : vector<8x64xbf16>, vector<64x64xbf16>, vector<8x64xf32> -> vector<8x64xf32>
    %c0_3 = arith.constant 0 : index
    %c0_4 = arith.constant 0 : index
    %3 = vector.load %arg3[%c0_3, %c0_4] : memref<1x64xf32, #tpu.memory_space<vmem>>, vector<1x64xf32>
    %4 = vector.broadcast %3 : vector<1x64xf32> to vector<8x64xf32>
    %5 = arith.addf %2, %4 : vector<8x64xf32>
    %cst_5 = arith.constant 0.000000e+00 : f32
    %6 = vector.broadcast %cst_5 : f32 to vector<8x64xf32>
    %7 = arith.maximumf %5, %6 : vector<8x64xf32>
    %8 = arith.truncf %7 : vector<8x64xf32> to vector<8x64xbf16>
    %c0_6 = arith.constant 0 : index
    %c0_7 = arith.constant 0 : index
    %9 = vector.load %arg4[%c0_6, %c0_7] : memref<64x64xbf16, #tpu.memory_space<vmem>>, vector<64x64xbf16>
    %cst_8 = arith.constant dense<0.000000e+00> : vector<8x64xf32>
    %10 = tpu.matmul %8, %9, %cst_8 {dimension_numbers = #tpu.dot_dimension_numbers<[1], [0], [0], [1], [0, 0, 1, 1], [], []>} : vector<8x64xbf16>, vector<64x64xbf16>, vector<8x64xf32> -> vector<8x64xf32>
    %c0_9 = arith.constant 0 : index
    %c0_10 = arith.constant 0 : index
    %11 = vector.load %arg5[%c0_9, %c0_10] : memref<1x64xf32, #tpu.memory_space<vmem>>, vector<1x64xf32>
    %12 = vector.broadcast %11 : vector<1x64xf32> to vector<8x64xf32>
    %13 = arith.addf %10, %12 : vector<8x64xf32>
    %cst_11 = arith.constant 0.000000e+00 : f32
    %14 = vector.broadcast %cst_11 : f32 to vector<8x64xf32>
    %15 = arith.maximumf %13, %14 : vector<8x64xf32>
    %16 = arith.truncf %15 : vector<8x64xf32> to vector<8x64xbf16>
    %c0_12 = arith.constant 0 : index
    %c0_13 = arith.constant 0 : index
    %17 = vector.load %arg6[%c0_12, %c0_13] : memref<64x128xbf16, #tpu.memory_space<vmem>>, vector<64x128xbf16>
    %cst_14 = arith.constant dense<0.000000e+00> : vector<8x128xf32>
    %18 = tpu.matmul %16, %17, %cst_14 {dimension_numbers = #tpu.dot_dimension_numbers<[1], [0], [0], [1], [0, 0, 1, 1], [], []>} : vector<8x64xbf16>, vector<64x128xbf16>, vector<8x128xf32> -> vector<8x128xf32>
    %c0_15 = arith.constant 0 : index
    %c0_16 = arith.constant 0 : index
    %19 = vector.load %arg7[%c0_15, %c0_16] : memref<1x128xf32, #tpu.memory_space<vmem>>, vector<1x128xf32>
    %20 = vector.broadcast %19 : vector<1x128xf32> to vector<8x128xf32>
    %21 = arith.addf %18, %20 : vector<8x128xf32>
    %c0_17 = arith.constant 0 : index
    %c0_18 = arith.constant 0 : index
    %22 = vector.load %arg8[%c0_17, %c0_18] : memref<8x128xf32, #tpu.memory_space<vmem>>, vector<8x128xf32>
    tpu.vector_store %arg8[%c0_17, %c0_18], %21 {strides = array<i32>} : memref<8x128xf32, #tpu.memory_space<vmem>>, vector<8x128xf32>,
    return
  }
  func.func @transform_0(%arg0: i32) -> (i32, i32) {
    %c0_i32 = arith.constant 0 : i32
    %c0_i32_0 = arith.constant 0 : i32
    return %arg0, %c0_i32 : i32, i32
  }
  func.func @transform_1(%arg0: i32) -> (i32, i32) {
    %c0_i32 = arith.constant 0 : i32
    %c0_i32_0 = arith.constant 0 : i32
    %c0_i32_1 = arith.constant 0 : i32
    return %c0_i32, %c0_i32_0 : i32, i32
  }
  func.func @transform_2(%arg0: i32) -> (i32, i32) {
    %c0_i32 = arith.constant 0 : i32
    %c0_i32_0 = arith.constant 0 : i32
    %c0_i32_1 = arith.constant 0 : i32
    return %c0_i32, %c0_i32_0 : i32, i32
  }
  func.func @transform_3(%arg0: i32) -> (i32, i32) {
    %c0_i32 = arith.constant 0 : i32
    %c0_i32_0 = arith.constant 0 : i32
    %c0_i32_1 = arith.constant 0 : i32
    return %c0_i32, %c0_i32_0 : i32, i32
  }
  func.func @transform_4(%arg0: i32) -> (i32, i32) {
    %c0_i32 = arith.constant 0 : i32
    %c0_i32_0 = arith.constant 0 : i32
    %c0_i32_1 = arith.constant 0 : i32
    return %c0_i32, %c0_i32_0 : i32, i32
  }
  func.func @transform_5(%arg0: i32) -> (i32, i32) {
    %c0_i32 = arith.constant 0 : i32
    %c0_i32_0 = arith.constant 0 : i32
    %c0_i32_1 = arith.constant 0 : i32
    return %c0_i32, %c0_i32_0 : i32, i32
  }
  func.func @transform_6(%arg0: i32) -> (i32, i32) {
    %c0_i32 = arith.constant 0 : i32
    %c0_i32_0 = arith.constant 0 : i32
    %c0_i32_1 = arith.constant 0 : i32
    return %c0_i32, %c0_i32_0 : i32, i32
  }
  func.func @transform_7(%arg0: i32) -> (i32, i32) {
    %c0_i32 = arith.constant 0 : i32
    %c0_i32_0 = arith.constant 0 : i32
    return %arg0, %c0_i32 : i32, i32
  }
}

module attributes {stable_mosaic.version = 11 : i64} {
  func.func @mlp3_kernel(%arg0: i32, %arg1: memref<8x32xbf16, #tpu.memory_space<vmem>>, %arg2: memref<32x32xbf16, #tpu.memory_space<vmem>>, %arg3: memref<1x32xf32, #tpu.memory_space<vmem>>, %arg4: memref<32x32xbf16, #tpu.memory_space<vmem>>, %arg5: memref<1x32xf32, #tpu.memory_space<vmem>>, %arg6: memref<32x128xbf16, #tpu.memory_space<vmem>>, %arg7: memref<1x128xf32, #tpu.memory_space<vmem>>, %arg8: memref<8x128xf32, #tpu.memory_space<vmem>>) attributes {dimension_semantics = [#tpu.dimension_semantics<parallel>], iteration_bounds = array<i64: 1>, scalar_prefetch = 0 : i64, scratch_operands = 0 : i64, tpu.core_type = #tpu.core_type<tc>, window_params = [{transform_indices = @transform_0, window_bounds = array<i64: 8, 32>}, {pipeline_mode = #tpu.pipeline_mode<synchronous>, transform_indices = @transform_1, window_bounds = array<i64: 32, 32>}, {pipeline_mode = #tpu.pipeline_mode<synchronous>, transform_indices = @transform_2, window_bounds = array<i64: 1, 32>}, {pipeline_mode = #tpu.pipeline_mode<synchronous>, transform_indices = @transform_3, window_bounds = array<i64: 32, 32>}, {pipeline_mode = #tpu.pipeline_mode<synchronous>, transform_indices = @transform_4, window_bounds = array<i64: 1, 32>}, {pipeline_mode = #tpu.pipeline_mode<synchronous>, transform_indices = @transform_5, window_bounds = array<i64: 32, 128>}, {pipeline_mode = #tpu.pipeline_mode<synchronous>, transform_indices = @transform_6, window_bounds = array<i64: 1, 128>}, {transform_indices = @transform_7, window_bounds = array<i64: 8, 128>}]} {
    %c0 = arith.constant 0 : index
    %c0_0 = arith.constant 0 : index
    %0 = vector.load %arg1[%c0, %c0_0] : memref<8x32xbf16, #tpu.memory_space<vmem>>, vector<8x32xbf16>
    %c0_1 = arith.constant 0 : index
    %c0_2 = arith.constant 0 : index
    %1 = vector.load %arg2[%c0_1, %c0_2] : memref<32x32xbf16, #tpu.memory_space<vmem>>, vector<32x32xbf16>
    %cst = arith.constant dense<0.000000e+00> : vector<8x32xf32>
    %2 = tpu.matmul %0, %1, %cst {dimension_numbers = #tpu.dot_dimension_numbers<[1], [0], [0], [1], [0, 0, 1, 1], [], []>} : vector<8x32xbf16>, vector<32x32xbf16>, vector<8x32xf32> -> vector<8x32xf32>
    %c0_3 = arith.constant 0 : index
    %c0_4 = arith.constant 0 : index
    %3 = vector.load %arg3[%c0_3, %c0_4] : memref<1x32xf32, #tpu.memory_space<vmem>>, vector<1x32xf32>
    %4 = vector.broadcast %3 : vector<1x32xf32> to vector<8x32xf32>
    %5 = arith.addf %2, %4 : vector<8x32xf32>
    %cst_5 = arith.constant 0.000000e+00 : f32
    %6 = vector.broadcast %cst_5 : f32 to vector<8x32xf32>
    %7 = arith.maximumf %5, %6 : vector<8x32xf32>
    %8 = arith.truncf %7 : vector<8x32xf32> to vector<8x32xbf16>
    %c0_6 = arith.constant 0 : index
    %c0_7 = arith.constant 0 : index
    %9 = vector.load %arg4[%c0_6, %c0_7] : memref<32x32xbf16, #tpu.memory_space<vmem>>, vector<32x32xbf16>
    %cst_8 = arith.constant dense<0.000000e+00> : vector<8x32xf32>
    %10 = tpu.matmul %8, %9, %cst_8 {dimension_numbers = #tpu.dot_dimension_numbers<[1], [0], [0], [1], [0, 0, 1, 1], [], []>} : vector<8x32xbf16>, vector<32x32xbf16>, vector<8x32xf32> -> vector<8x32xf32>
    %c0_9 = arith.constant 0 : index
    %c0_10 = arith.constant 0 : index
    %11 = vector.load %arg5[%c0_9, %c0_10] : memref<1x32xf32, #tpu.memory_space<vmem>>, vector<1x32xf32>
    %12 = vector.broadcast %11 : vector<1x32xf32> to vector<8x32xf32>
    %13 = arith.addf %10, %12 : vector<8x32xf32>
    %cst_11 = arith.constant 0.000000e+00 : f32
    %14 = vector.broadcast %cst_11 : f32 to vector<8x32xf32>
    %15 = arith.maximumf %13, %14 : vector<8x32xf32>
    %16 = arith.truncf %15 : vector<8x32xf32> to vector<8x32xbf16>
    %c0_12 = arith.constant 0 : index
    %c0_13 = arith.constant 0 : index
    %17 = vector.load %arg6[%c0_12, %c0_13] : memref<32x128xbf16, #tpu.memory_space<vmem>>, vector<32x128xbf16>
    %cst_14 = arith.constant dense<0.000000e+00> : vector<8x128xf32>
    %18 = tpu.matmul %16, %17, %cst_14 {dimension_numbers = #tpu.dot_dimension_numbers<[1], [0], [0], [1], [0, 0, 1, 1], [], []>} : vector<8x32xbf16>, vector<32x128xbf16>, vector<8x128xf32> -> vector<8x128xf32>
    %c0_15 = arith.constant 0 : index
    %c0_16 = arith.constant 0 : index
    %19 = vector.load %arg7[%c0_15, %c0_16] : memref<1x128xf32, #tpu.memory_space<vmem>>, vector<1x128xf32>
    %20 = vector.broadcast %19 : vector<1x128xf32> to vector<8x128xf32>
    %21 = arith.addf %18, %20 : vector<8x128xf32>
    %c0_17 = arith.constant 0 : index
    %c0_18 = arith.constant 0 : index
    %22 = vector.load %arg8[%c0_17, %c0_18] : memref<8x128xf32, #tpu.memory_space<vmem>>, vector<8x128xf32>
    tpu.vector_store %arg8[%c0_17, %c0_18], %21 {strides = array<i32>} : memref<8x128xf32, #tpu.memory_space<vmem>>, vector<8x128xf32>,
    return
  }
  func.func @transform_0(%arg0: i32) -> (i32, i32) {
    %c0_i32 = arith.constant 0 : i32
    %c0_i32_0 = arith.constant 0 : i32
    return %arg0, %c0_i32 : i32, i32
  }
  func.func @transform_1(%arg0: i32) -> (i32, i32) {
    %c0_i32 = arith.constant 0 : i32
    %c0_i32_0 = arith.constant 0 : i32
    %c0_i32_1 = arith.constant 0 : i32
    return %c0_i32, %c0_i32_0 : i32, i32
  }
  func.func @transform_2(%arg0: i32) -> (i32, i32) {
    %c0_i32 = arith.constant 0 : i32
    %c0_i32_0 = arith.constant 0 : i32
    %c0_i32_1 = arith.constant 0 : i32
    return %c0_i32, %c0_i32_0 : i32, i32
  }
  func.func @transform_3(%arg0: i32) -> (i32, i32) {
    %c0_i32 = arith.constant 0 : i32
    %c0_i32_0 = arith.constant 0 : i32
    %c0_i32_1 = arith.constant 0 : i32
    return %c0_i32, %c0_i32_0 : i32, i32
  }
  func.func @transform_4(%arg0: i32) -> (i32, i32) {
    %c0_i32 = arith.constant 0 : i32
    %c0_i32_0 = arith.constant 0 : i32
    %c0_i32_1 = arith.constant 0 : i32
    return %c0_i32, %c0_i32_0 : i32, i32
  }
  func.func @transform_5(%arg0: i32) -> (i32, i32) {
    %c0_i32 = arith.constant 0 : i32
    %c0_i32_0 = arith.constant 0 : i32
    %c0_i32_1 = arith.constant 0 : i32
    return %c0_i32, %c0_i32_0 : i32, i32
  }
  func.func @transform_6(%arg0: i32) -> (i32, i32) {
    %c0_i32 = arith.constant 0 : i32
    %c0_i32_0 = arith.constant 0 : i32
    %c0_i32_1 = arith.constant 0 : i32
    return %c0_i32, %c0_i32_0 : i32, i32
  }
  func.func @transform_7(%arg0: i32) -> (i32, i32) {
    %c0_i32 = arith.constant 0 : i32
    %c0_i32_0 = arith.constant 0 : i32
    return %arg0, %c0_i32 : i32, i32
  }
}

</mosaic_0001>

<llo_original>
// kernel: resnet_gnn_forward.10
$region0: #{resnet_gnn_forward.10}
  #allocation0 [shape = 'u32[]', space=smem, size = 0x4, offset = 0x4, fixed_abs, tag = 'smem constant byte address 0x4 - core index']
  #allocation1 [shape = 'u32[144,128]{1,0:T(1,128)}', space=vmem, size = 0x12000, scoped, tag = 'internal scratch']
  %s0 = inlined_call_operand.vmem [shape: bf16[16,5], index: 0, kind: input, shape index: {}]
  %s1 = inlined_call_operand.vmem [shape: bf16[5,32], index: 1, kind: input, shape index: {}]
  %s2 = inlined_call_operand.vmem [shape: f32[1,32], index: 2, kind: input, shape index: {}, may-alias: {2,4}]
  %s3 = inlined_call_operand.vmem [shape: bf16[32,32], index: 3, kind: input, shape index: {}]
  %s4 = inlined_call_operand.vmem [shape: f32[1,32], index: 4, kind: input, shape index: {}, may-alias: {2,4}]
  %s5 = inlined_call_operand.vmem [shape: bf16[32,128], index: 5, kind: input, shape index: {}]
  %s6 = inlined_call_operand.vmem [shape: f32[1,128], index: 6, kind: input, shape index: {}]
  %s7 = inlined_call_operand.vmem [shape: f32[16,128], index: 7, kind: output, shape index: {}]
  %s8 = sld [smem:[#allocation0]]
  $region38: #{resnet_gnn_forward.10} parent=0
    _
  %s10 = ssub.s32 1, %s8
  %s11 = scalar_select 0, %s10, %s8
  // Predicated region
  $region2: #{resnet_gnn_forward.10} parent=0 // pred_check
    _
  $region3: #{resnet_gnn_forward.10} parent=0 // pred_check_branch
    %13 = sbr.rel (0) target = $region5
  $region4: #{resnet_gnn_forward.10} parent=0 // pred_region
    _
  $region5: #{resnet_gnn_forward.10} parent=0 // pred_fallthru
    _
  // Predicated region
  $region6: #{resnet_gnn_forward.10} parent=0 // pred_check
    _
  $region7: #{resnet_gnn_forward.10} parent=0 // pred_check_branch
    %15 = sbr.rel (0) target = $region9
  $region8: #{resnet_gnn_forward.10} parent=0 // pred_region
    _
  $region9: #{resnet_gnn_forward.10} parent=0 // pred_fallthru
    _
  // Predicated region
  $region10: #{resnet_gnn_forward.10} parent=0 // pred_check
    _
  $region11: #{resnet_gnn_forward.10} parent=0 // pred_check_branch
    %17 = sbr.rel (0) target = $region13
  $region12: #{resnet_gnn_forward.10} parent=0 // pred_region
    _
  $region13: #{resnet_gnn_forward.10} parent=0 // pred_fallthru
    _
  // Predicated region
  $region14: #{resnet_gnn_forward.10} parent=0 // pred_check
    _
  $region15: #{resnet_gnn_forward.10} parent=0 // pred_check_branch
    %19 = sbr.rel (0) target = $region17
  $region16: #{resnet_gnn_forward.10} parent=0 // pred_region
    _
  $region17: #{resnet_gnn_forward.10} parent=0 // pred_fallthru
    _
  // Predicated region
  $region18: #{resnet_gnn_forward.10} parent=0 // pred_check
    _
  $region19: #{resnet_gnn_forward.10} parent=0 // pred_check_branch
    %21 = sbr.rel (0) target = $region21
  $region20: #{resnet_gnn_forward.10} parent=0 // pred_region
    _
  $region21: #{resnet_gnn_forward.10} parent=0 // pred_fallthru
    _
  // Predicated region
  $region22: #{resnet_gnn_forward.10} parent=0 // pred_check
    _
  $region23: #{resnet_gnn_forward.10} parent=0 // pred_check_branch
    %23 = sbr.rel (0) target = $region25
  $region24: #{resnet_gnn_forward.10} parent=0 // pred_region
    _
  $region25: #{resnet_gnn_forward.10} parent=0 // pred_fallthru
    _
  // Predicated region
  $region26: #{resnet_gnn_forward.10} parent=0 // pred_check
    _
  $region27: #{resnet_gnn_forward.10} parent=0 // pred_check_branch
    %25 = sbr.rel (0) target = $region29
  $region28: #{resnet_gnn_forward.10} parent=0 // pred_region
    _
  $region29: #{resnet_gnn_forward.10} parent=0 // pred_fallthru
    _
  %v27 = vld [vmem:[%s0] sm:$0xf]
  %v28 = vld [vmem:[%s0 + $0x4] sm:$0xf]
  %v29 = vld [vmem:[%s1] sm:$0x7]
  %v30 = vld [vmem:[%s2] sm:$0x1]
  %v32 = vlaneseq
  %v33 = vshrl.u32 %v32, 7
  %v34 = vsub.s32 0, %v33
  %v35 = vrot.slane %v30, %v34
  %v39 = vunpack.c.l.b16 %v27
  %v40 = vunpack.c.l.b16 %v28
  %v41 = vpack.c.b16 %v40, %v39
  %vm42 = vcmask 39936
  %v44 = vsel %vm42, %v41, 0
  %vm46 = vcmask 1041408
  %vm47 = vcmask 1042432
  %v48 = vsel %vm46, 4294967295, 65535
  %v49 = vsel %vm47, %v48, 0
  %v51 = vand.u32 %v29, %v49
  %53 = vmatprep.subr.bf16.mxu0 0
  %54 = vmatpush1.bf16.msra.mxu0 %v51
  %55 = vmatprep.subr.bf16.mxu0 0
  %56 = vmatpush1.bf16.msra.mxu0 0
  %57 = vmatprep.subr.bf16.mxu0 0
  %58 = vmatpush1.bf16.msra.mxu0 0
  %59 = vmatprep.subr.bf16.mxu0 0
  %60 = vmatpush1.bf16.msra.mxu0 0
  %61 = vmatprep.subr.bf16.mxu0 0
  %62 = vmatpush1.bf16.msra.mxu0 0
  %63 = vmatprep.subr.bf16.mxu0 0
  %64 = vmatpush1.bf16.msra.mxu0 0
  %65 = vmatprep.subr.bf16.mxu0 0
  %66 = vmatpush1.bf16.msra.mxu0 0
  %67 = vmatprep.subr.bf16.mxu0 0
  %68 = vmatpush1.bf16.msra.mxu0 0
  %69 = vmatprep.subr.bf16.mxu0 0
  %70 = vmatpush1.bf16.msra.mxu0 0
  %71 = vmatprep.subr.bf16.mxu0 0
  %72 = vmatpush1.bf16.msra.mxu0 0
  %73 = vmatprep.subr.bf16.mxu0 0
  %74 = vmatpush1.bf16.msra.mxu0 0
  %75 = vmatprep.subr.bf16.mxu0 0
  %76 = vmatpush1.bf16.msra.mxu0 0
  %77 = vmatprep.subr.bf16.mxu0 0
  %78 = vmatpush1.bf16.msra.mxu0 0
  %79 = vmatprep.subr.bf16.mxu0 0
  %80 = vmatpush1.bf16.msra.mxu0 0
  %81 = vmatprep.subr.bf16.mxu0 0
  %82 = vmatpush1.bf16.msra.mxu0 0
  %83 = vmatprep.subr.bf16.mxu0 0
  %84 = vmatpush1.bf16.msra.mxu0 0
  %85 = vmatprep.mubr.bf16.mxu0 0
  %86 = vmatmul.mubr.bf16.gmra.mrb[0].mxu0 %v44
  %v87 = vpop.f32.mrb[0].mxu0
  %v88 = vadd.f32 %v35, %v87
  %v89 = vpop.f32.mrb[0].mxu0
  %v90 = vpop.f32.mrb[0].mxu0
  %v91 = vadd.f32 %v35, %v90
  %v92 = vpop.f32.mrb[0].mxu0
  %93 = vdwg.mxu0
  %v94 = vmax.f32 %v88, 0.0
  %v95 = vmax.f32 %v91, 0.0
  %v96 = vpack.c.bf16 %v95, %v94
  %v97 = vld [vmem:[%s3] sm:$0xf]
  %v98 = vld [vmem:[%s3 + $0x4] sm:$0xf]
  %v99 = vld [vmem:[%s3 + $0x8] sm:$0xf]
  %v100 = vld [vmem:[%s3 + $0xc] sm:$0xf]
  %v101 = vld [vmem:[%s4] sm:$0x1]
  %v103 = vlaneseq
  %v104 = vshrl.u32 %v103, 7
  %v105 = vsub.s32 0, %v104
  %v106 = vrot.slane %v101, %v105
  %v112 = vunpack.c.l.b16 %v97
  %v113 = vunpack.c.l.b16 %v98
  %v114 = vunpack.c.l.b16 %v99
  %v115 = vunpack.c.l.b16 %v100
  %v116 = vpack.c.b16 %v113, %v112
  %v117 = vpack.c.b16 %v115, %v114
  %vm120 = vcmask 261120
  %v122 = vsel %vm120, %v96, 0
  %124 = vmatprep.subr.bf16.mxu0 0
  %125 = vmatpush1.bf16.msra.mxu0 %v116
  %126 = vmatprep.subr.bf16.mxu0 0
  %127 = vmatpush1.bf16.msra.mxu0 %v117
  %128 = vmatprep.subr.bf16.mxu0 0
  %129 = vmatpush1.bf16.msra.mxu0 0
  %130 = vmatprep.subr.bf16.mxu0 0
  %131 = vmatpush1.bf16.msra.mxu0 0
  %132 = vmatprep.subr.bf16.mxu0 0
  %133 = vmatpush1.bf16.msra.mxu0 0
  %134 = vmatprep.subr.bf16.mxu0 0
  %135 = vmatpush1.bf16.msra.mxu0 0
  %136 = vmatprep.subr.bf16.mxu0 0
  %137 = vmatpush1.bf16.msra.mxu0 0
  %138 = vmatprep.subr.bf16.mxu0 0
  %139 = vmatpush1.bf16.msra.mxu0 0
  %140 = vmatprep.subr.bf16.mxu0 0
  %141 = vmatpush1.bf16.msra.mxu0 0
  %142 = vmatprep.subr.bf16.mxu0 0
  %143 = vmatpush1.bf16.msra.mxu0 0
  %144 = vmatprep.subr.bf16.mxu0 0
  %145 = vmatpush1.bf16.msra.mxu0 0
  %146 = vmatprep.subr.bf16.mxu0 0
  %147 = vmatpush1.bf16.msra.mxu0 0
  %148 = vmatprep.subr.bf16.mxu0 0
  %149 = vmatpush1.bf16.msra.mxu0 0
  %150 = vmatprep.subr.bf16.mxu0 0
  %151 = vmatpush1.bf16.msra.mxu0 0
  %152 = vmatprep.subr.bf16.mxu0 0
  %153 = vmatpush1.bf16.msra.mxu0 0
  %154 = vmatprep.subr.bf16.mxu0 0
  %155 = vmatpush1.bf16.msra.mxu0 0
  %156 = vmatprep.mubr.bf16.mxu0 0
  %157 = vmatmul.mubr.bf16.gmra.mrb[0].mxu0 %v122
  %v158 = vpop.f32.mrb[0].mxu0
  %v159 = vadd.f32 %v106, %v158
  %v160 = vpop.f32.mrb[0].mxu0
  %v161 = vpop.f32.mrb[0].mxu0
  %v162 = vadd.f32 %v106, %v161
  %v163 = vpop.f32.mrb[0].mxu0
  %164 = vdwg.mxu0
  %v165 = vmax.f32 %v159, 0.0
  %v166 = vmax.f32 %v162, 0.0
  %v167 = vpack.c.bf16 %v166, %v165
  %v168 = vld [vmem:[%s5] sm:$0xf]
  %v169 = vld [vmem:[%s5 + $0x4] sm:$0xf]
  %v170 = vld [vmem:[%s5 + $0x8] sm:$0xf]
  %v171 = vld [vmem:[%s5 + $0xc] sm:$0xf]
  %v172 = vld [vmem:[%s6] sm:$0x1]
  %v174 = vlaneseq
  %v175 = vshrl.u32 %v174, 7
  %v176 = vsub.s32 0, %v175
  %v177 = vrot.slane %v172, %v176
  %v183 = vunpack.c.l.b16 %v168
  %v184 = vunpack.c.l.b16 %v169
  %v185 = vunpack.c.l.b16 %v170
  %v186 = vunpack.c.l.b16 %v171
  %v187 = vpack.c.b16 %v184, %v183
  %v188 = vpack.c.b16 %v186, %v185
  %v192 = vsel %vm120, %v167, 0
  %194 = vmatprep.subr.bf16.mxu0 0
  %195 = vmatpush1.bf16.msra.mxu0 %v187
  %196 = vmatprep.subr.bf16.mxu0 0
  %197 = vmatpush1.bf16.msra.mxu0 %v188
  %198 = vmatprep.subr.bf16.mxu0 0
  %199 = vmatpush1.bf16.msra.mxu0 0
  %200 = vmatprep.subr.bf16.mxu0 0
  %201 = vmatpush1.bf16.msra.mxu0 0
  %202 = vmatprep.subr.bf16.mxu0 0
  %203 = vmatpush1.bf16.msra.mxu0 0
  %204 = vmatprep.subr.bf16.mxu0 0
  %205 = vmatpush1.bf16.msra.mxu0 0
  %206 = vmatprep.subr.bf16.mxu0 0
  %207 = vmatpush1.bf16.msra.mxu0 0
  %208 = vmatprep.subr.bf16.mxu0 0
  %209 = vmatpush1.bf16.msra.mxu0 0
  %210 = vmatprep.subr.bf16.mxu0 0
  %211 = vmatpush1.bf16.msra.mxu0 0
  %212 = vmatprep.subr.bf16.mxu0 0
  %213 = vmatpush1.bf16.msra.mxu0 0
  %214 = vmatprep.subr.bf16.mxu0 0
  %215 = vmatpush1.bf16.msra.mxu0 0
  %216 = vmatprep.subr.bf16.mxu0 0
  %217 = vmatpush1.bf16.msra.mxu0 0
  %218 = vmatprep.subr.bf16.mxu0 0
  %219 = vmatpush1.bf16.msra.mxu0 0
  %220 = vmatprep.subr.bf16.mxu0 0
  %221 = vmatpush1.bf16.msra.mxu0 0
  %222 = vmatprep.subr.bf16.mxu0 0
  %223 = vmatpush1.bf16.msra.mxu0 0
  %224 = vmatprep.subr.bf16.mxu0 0
  %225 = vmatpush1.bf16.msra.mxu0 0
  %226 = vmatprep.mubr.bf16.mxu0 0
  %227 = vmatmul.mubr.bf16.gmra.mrb[0].mxu0 %v192
  %v228 = vpop.f32.mrb[0].mxu0
  %v229 = vadd.f32 %v177, %v228
  %v230 = vpop.f32.mrb[0].mxu0
  %v231 = vpop.f32.mrb[0].mxu0
  %v232 = vadd.f32 %v177, %v231
  %v233 = vpop.f32.mrb[0].mxu0
  %234 = vdwg.mxu0
  %235 = vst [vmem:[%s7] sm:$0xff] %v229
  %236 = vst [vmem:[%s7 + $0x8] sm:$0xff] %v232
  // Predicated region
  $region30: #{resnet_gnn_forward.10} parent=0 // pred_check
    _
  $region31: #{resnet_gnn_forward.10} parent=0 // pred_check_branch
    %238 = sbr.rel (0) target = $region33
  $region32: #{resnet_gnn_forward.10} parent=0 // pred_region
    _
  $region33: #{resnet_gnn_forward.10} parent=0 // pred_fallthru
    _
  // Predicated region
  $region34: #{resnet_gnn_forward.10} parent=0 // pred_check
    _
  $region35: #{resnet_gnn_forward.10} parent=0 // pred_check_branch
    %240 = sbr.rel (0) target = $region37
  $region36: #{resnet_gnn_forward.10} parent=0 // pred_region
    _
  $region37: #{resnet_gnn_forward.10} parent=0 // pred_fallthru
    _

// kernel: resnet_gnn_forward.11
$region0: #{resnet_gnn_forward.11}
  #allocation0 [shape = 'u32[]', space=smem, size = 0x4, offset = 0x4, fixed_abs, tag = 'smem constant byte address 0x4 - core index']
  #allocation1 [shape = 'u32[144,128]{1,0:T(1,128)}', space=vmem, size = 0x12000, scoped, tag = 'internal scratch']
  %s0 = inlined_call_operand.vmem [shape: bf16[16,96], index: 0, kind: input, shape index: {}]
  %s1 = inlined_call_operand.vmem [shape: bf16[96,96], index: 1, kind: input, shape index: {}]
  %s2 = inlined_call_operand.vmem [shape: f32[1,96], index: 2, kind: input, shape index: {}, may-alias: {2,4}]
  %s3 = inlined_call_operand.vmem [shape: bf16[96,96], index: 3, kind: input, shape index: {}]
  %s4 = inlined_call_operand.vmem [shape: f32[1,96], index: 4, kind: input, shape index: {}, may-alias: {2,4}]
  %s5 = inlined_call_operand.vmem [shape: bf16[96,128], index: 5, kind: input, shape index: {}]
  %s6 = inlined_call_operand.vmem [shape: f32[1,128], index: 6, kind: input, shape index: {}]
  %s7 = inlined_call_operand.vmem [shape: f32[16,128], index: 7, kind: output, shape index: {}]
  %s8 = sld [smem:[#allocation0]]
  $region38: #{resnet_gnn_forward.11} parent=0
    _
  %s10 = ssub.s32 1, %s8
  %s11 = scalar_select 0, %s10, %s8
  // Predicated region
  $region2: #{resnet_gnn_forward.11} parent=0 // pred_check
    _
  $region3: #{resnet_gnn_forward.11} parent=0 // pred_check_branch
    %13 = sbr.rel (0) target = $region5
  $region4: #{resnet_gnn_forward.11} parent=0 // pred_region
    _
  $region5: #{resnet_gnn_forward.11} parent=0 // pred_fallthru
    _
  // Predicated region
  $region6: #{resnet_gnn_forward.11} parent=0 // pred_check
    _
  $region7: #{resnet_gnn_forward.11} parent=0 // pred_check_branch
    %15 = sbr.rel (0) target = $region9
  $region8: #{resnet_gnn_forward.11} parent=0 // pred_region
    _
  $region9: #{resnet_gnn_forward.11} parent=0 // pred_fallthru
    _
  // Predicated region
  $region10: #{resnet_gnn_forward.11} parent=0 // pred_check
    _
  $region11: #{resnet_gnn_forward.11} parent=0 // pred_check_branch
    %17 = sbr.rel (0) target = $region13
  $region12: #{resnet_gnn_forward.11} parent=0 // pred_region
    _
  $region13: #{resnet_gnn_forward.11} parent=0 // pred_fallthru
    _
  // Predicated region
  $region14: #{resnet_gnn_forward.11} parent=0 // pred_check
    _
  $region15: #{resnet_gnn_forward.11} parent=0 // pred_check_branch
    %19 = sbr.rel (0) target = $region17
  $region16: #{resnet_gnn_forward.11} parent=0 // pred_region
    _
  $region17: #{resnet_gnn_forward.11} parent=0 // pred_fallthru
    _
  // Predicated region
  $region18: #{resnet_gnn_forward.11} parent=0 // pred_check
    _
  $region19: #{resnet_gnn_forward.11} parent=0 // pred_check_branch
    %21 = sbr.rel (0) target = $region21
  $region20: #{resnet_gnn_forward.11} parent=0 // pred_region
    _
  $region21: #{resnet_gnn_forward.11} parent=0 // pred_fallthru
    _
  // Predicated region
  $region22: #{resnet_gnn_forward.11} parent=0 // pred_check
    _
  $region23: #{resnet_gnn_forward.11} parent=0 // pred_check_branch
    %23 = sbr.rel (0) target = $region25
  $region24: #{resnet_gnn_forward.11} parent=0 // pred_region
    _
  $region25: #{resnet_gnn_forward.11} parent=0 // pred_fallthru
    _
  // Predicated region
  $region26: #{resnet_gnn_forward.11} parent=0 // pred_check
    _
  $region27: #{resnet_gnn_forward.11} parent=0 // pred_check_branch
    %25 = sbr.rel (0) target = $region29
  $region28: #{resnet_gnn_forward.11} parent=0 // pred_region
    _
  $region29: #{resnet_gnn_forward.11} parent=0 // pred_fallthru
    _
  %v27 = vld [vmem:[%s0] sm:$0xf]
  %v28 = vld [vmem:[%s0 + $0x4] sm:$0xf]
  %v29 = vld [vmem:[%s1] sm:$0xf]
  %v30 = vld [vmem:[%s1 + $0x4] sm:$0xf]
  %v31 = vld [vmem:[%s1 + $0x8] sm:$0xf]
  %v32 = vld [vmem:[%s1 + $0xc] sm:$0xf]
  %v33 = vld [vmem:[%s1 + $0x10] sm:$0xf]
  %v34 = vld [vmem:[%s1 + $0x14] sm:$0xf]
  %v35 = vld [vmem:[%s1 + $0x18] sm:$0xf]
  %v36 = vld [vmem:[%s1 + $0x1c] sm:$0xf]
  %v37 = vld [vmem:[%s1 + $0x20] sm:$0xf]
  %v38 = vld [vmem:[%s1 + $0x24] sm:$0xf]
  %v39 = vld [vmem:[%s1 + $0x28] sm:$0xf]
  %v40 = vld [vmem:[%s1 + $0x2c] sm:$0xf]
  %v41 = vld [vmem:[%s2] sm:$0x1]
  %v43 = vlaneseq
  %v44 = vshrl.u32 %v43, 7
  %v45 = vsub.s32 0, %v44
  %v46 = vrot.slane %v41, %v45
  %v50 = vunpack.c.l.b16 %v27
  %v51 = vunpack.c.l.b16 %v28
  %v52 = vpack.c.b16 %v51, %v50
  %v65 = vunpack.c.l.b16 %v29
  %v66 = vunpack.c.l.b16 %v30
  %v67 = vunpack.c.l.b16 %v31
  %v68 = vunpack.c.l.b16 %v32
  %v69 = vunpack.c.l.b16 %v33
  %v70 = vunpack.c.l.b16 %v34
  %v71 = vunpack.c.l.b16 %v35
  %v72 = vunpack.c.l.b16 %v36
  %v73 = vunpack.c.l.b16 %v37
  %v74 = vunpack.c.l.b16 %v38
  %v75 = vunpack.c.l.b16 %v39
  %v76 = vunpack.c.l.b16 %v40
  %v77 = vpack.c.b16 %v66, %v65
  %v78 = vpack.c.b16 %v68, %v67
  %v79 = vpack.c.b16 %v70, %v69
  %v80 = vpack.c.b16 %v72, %v71
  %v81 = vpack.c.b16 %v74, %v73
  %v82 = vpack.c.b16 %v76, %v75
  %vm89 = vcmask 785408
  %v91 = vsel %vm89, %v52, 0
  %93 = vmatprep.subr.bf16.mxu0 0
  %94 = vmatpush1.bf16.msra.mxu0 %v77
  %95 = vmatprep.subr.bf16.mxu0 0
  %96 = vmatpush1.bf16.msra.mxu0 %v78
  %97 = vmatprep.subr.bf16.mxu0 0
  %98 = vmatpush1.bf16.msra.mxu0 %v79
  %99 = vmatprep.subr.bf16.mxu0 0
  %100 = vmatpush1.bf16.msra.mxu0 %v80
  %101 = vmatprep.subr.bf16.mxu0 0
  %102 = vmatpush1.bf16.msra.mxu0 %v81
  %103 = vmatprep.subr.bf16.mxu0 0
  %104 = vmatpush1.bf16.msra.mxu0 %v82
  %105 = vmatprep.subr.bf16.mxu0 0
  %106 = vmatpush1.bf16.msra.mxu0 0
  %107 = vmatprep.subr.bf16.mxu0 0
  %108 = vmatpush1.bf16.msra.mxu0 0
  %109 = vmatprep.subr.bf16.mxu0 0
  %110 = vmatpush1.bf16.msra.mxu0 0
  %111 = vmatprep.subr.bf16.mxu0 0
  %112 = vmatpush1.bf16.msra.mxu0 0
  %113 = vmatprep.subr.bf16.mxu0 0
  %114 = vmatpush1.bf16.msra.mxu0 0
  %115 = vmatprep.subr.bf16.mxu0 0
  %116 = vmatpush1.bf16.msra.mxu0 0
  %117 = vmatprep.subr.bf16.mxu0 0
  %118 = vmatpush1.bf16.msra.mxu0 0
  %119 = vmatprep.subr.bf16.mxu0 0
  %120 = vmatpush1.bf16.msra.mxu0 0
  %121 = vmatprep.subr.bf16.mxu0 0
  %122 = vmatpush1.bf16.msra.mxu0 0
  %123 = vmatprep.subr.bf16.mxu0 0
  %124 = vmatpush1.bf16.msra.mxu0 0
  %125 = vmatprep.mubr.bf16.mxu0 0
  %126 = vmatmul.mubr.bf16.gmra.mrb[0].mxu0 %v91
  %v127 = vpop.f32.mrb[0].mxu0
  %v128 = vadd.f32 %v46, %v127
  %v129 = vpop.f32.mrb[0].mxu0
  %v130 = vpop.f32.mrb[0].mxu0
  %v131 = vadd.f32 %v46, %v130
  %v132 = vpop.f32.mrb[0].mxu0
  %133 = vdwg.mxu0
  %v134 = vmax.f32 %v128, 0.0
  %v135 = vmax.f32 %v131, 0.0
  %v136 = vpack.c.bf16 %v135, %v134
  %v137 = vld [vmem:[%s3] sm:$0xf]
  %v138 = vld [vmem:[%s3 + $0x4] sm:$0xf]
  %v139 = vld [vmem:[%s3 + $0x8] sm:$0xf]
  %v140 = vld [vmem:[%s3 + $0xc] sm:$0xf]
  %v141 = vld [vmem:[%s3 + $0x10] sm:$0xf]
  %v142 = vld [vmem:[%s3 + $0x14] sm:$0xf]
  %v143 = vld [vmem:[%s3 + $0x18] sm:$0xf]
  %v144 = vld [vmem:[%s3 + $0x1c] sm:$0xf]
  %v145 = vld [vmem:[%s3 + $0x20] sm:$0xf]
  %v146 = vld [vmem:[%s3 + $0x24] sm:$0xf]
  %v147 = vld [vmem:[%s3 + $0x28] sm:$0xf]
  %v148 = vld [vmem:[%s3 + $0x2c] sm:$0xf]
  %v149 = vld [vmem:[%s4] sm:$0x1]
  %v151 = vlaneseq
  %v152 = vshrl.u32 %v151, 7
  %v153 = vsub.s32 0, %v152
  %v154 = vrot.slane %v149, %v153
  %v168 = vunpack.c.l.b16 %v137
  %v169 = vunpack.c.l.b16 %v138
  %v170 = vunpack.c.l.b16 %v139
  %v171 = vunpack.c.l.b16 %v140
  %v172 = vunpack.c.l.b16 %v141
  %v173 = vunpack.c.l.b16 %v142
  %v174 = vunpack.c.l.b16 %v143
  %v175 = vunpack.c.l.b16 %v144
  %v176 = vunpack.c.l.b16 %v145
  %v177 = vunpack.c.l.b16 %v146
  %v178 = vunpack.c.l.b16 %v147
  %v179 = vunpack.c.l.b16 %v148
  %v180 = vpack.c.b16 %v169, %v168
  %v181 = vpack.c.b16 %v171, %v170
  %v182 = vpack.c.b16 %v173, %v172
  %v183 = vpack.c.b16 %v175, %v174
  %v184 = vpack.c.b16 %v177, %v176
  %v185 = vpack.c.b16 %v179, %v178
  %v193 = vsel %vm89, %v136, 0
  %195 = vmatprep.subr.bf16.mxu0 0
  %196 = vmatpush1.bf16.msra.mxu0 %v180
  %197 = vmatprep.subr.bf16.mxu0 0
  %198 = vmatpush1.bf16.msra.mxu0 %v181
  %199 = vmatprep.subr.bf16.mxu0 0
  %200 = vmatpush1.bf16.msra.mxu0 %v182
  %201 = vmatprep.subr.bf16.mxu0 0
  %202 = vmatpush1.bf16.msra.mxu0 %v183
  %203 = vmatprep.subr.bf16.mxu0 0
  %204 = vmatpush1.bf16.msra.mxu0 %v184
  %205 = vmatprep.subr.bf16.mxu0 0
  %206 = vmatpush1.bf16.msra.mxu0 %v185
  %207 = vmatprep.subr.bf16.mxu0 0
  %208 = vmatpush1.bf16.msra.mxu0 0
  %209 = vmatprep.subr.bf16.mxu0 0
  %210 = vmatpush1.bf16.msra.mxu0 0
  %211 = vmatprep.subr.bf16.mxu0 0
  %212 = vmatpush1.bf16.msra.mxu0 0
  %213 = vmatprep.subr.bf16.mxu0 0
  %214 = vmatpush1.bf16.msra.mxu0 0
  %215 = vmatprep.subr.bf16.mxu0 0
  %216 = vmatpush1.bf16.msra.mxu0 0
  %217 = vmatprep.subr.bf16.mxu0 0
  %218 = vmatpush1.bf16.msra.mxu0 0
  %219 = vmatprep.subr.bf16.mxu0 0
  %220 = vmatpush1.bf16.msra.mxu0 0
  %221 = vmatprep.subr.bf16.mxu0 0
  %222 = vmatpush1.bf16.msra.mxu0 0
  %223 = vmatprep.subr.bf16.mxu0 0
  %224 = vmatpush1.bf16.msra.mxu0 0
  %225 = vmatprep.subr.bf16.mxu0 0
  %226 = vmatpush1.bf16.msra.mxu0 0
  %227 = vmatprep.mubr.bf16.mxu0 0
  %228 = vmatmul.mubr.bf16.gmra.mrb[0].mxu0 %v193
  %v229 = vpop.f32.mrb[0].mxu0
  %v230 = vadd.f32 %v154, %v229
  %v231 = vpop.f32.mrb[0].mxu0
  %v232 = vpop.f32.mrb[0].mxu0
  %v233 = vadd.f32 %v154, %v232
  %v234 = vpop.f32.mrb[0].mxu0
  %235 = vdwg.mxu0
  %v236 = vmax.f32 %v230, 0.0
  %v237 = vmax.f32 %v233, 0.0
  %v238 = vpack.c.bf16 %v237, %v236
  %v239 = vld [vmem:[%s5] sm:$0xf]
  %v240 = vld [vmem:[%s5 + $0x4] sm:$0xf]
  %v241 = vld [vmem:[%s5 + $0x8] sm:$0xf]
  %v242 = vld [vmem:[%s5 + $0xc] sm:$0xf]
  %v243 = vld [vmem:[%s5 + $0x10] sm:$0xf]
  %v244 = vld [vmem:[%s5 + $0x14] sm:$0xf]
  %v245 = vld [vmem:[%s5 + $0x18] sm:$0xf]
  %v246 = vld [vmem:[%s5 + $0x1c] sm:$0xf]
  %v247 = vld [vmem:[%s5 + $0x20] sm:$0xf]
  %v248 = vld [vmem:[%s5 + $0x24] sm:$0xf]
  %v249 = vld [vmem:[%s5 + $0x28] sm:$0xf]
  %v250 = vld [vmem:[%s5 + $0x2c] sm:$0xf]
  %v251 = vld [vmem:[%s6] sm:$0x1]
  %v253 = vlaneseq
  %v254 = vshrl.u32 %v253, 7
  %v255 = vsub.s32 0, %v254
  %v256 = vrot.slane %v251, %v255
  %v270 = vunpack.c.l.b16 %v239
  %v271 = vunpack.c.l.b16 %v240
  %v272 = vunpack.c.l.b16 %v241
  %v273 = vunpack.c.l.b16 %v242
  %v274 = vunpack.c.l.b16 %v243
  %v275 = vunpack.c.l.b16 %v244
  %v276 = vunpack.c.l.b16 %v245
  %v277 = vunpack.c.l.b16 %v246
  %v278 = vunpack.c.l.b16 %v247
  %v279 = vunpack.c.l.b16 %v248
  %v280 = vunpack.c.l.b16 %v249
  %v281 = vunpack.c.l.b16 %v250
  %v282 = vpack.c.b16 %v271, %v270
  %v283 = vpack.c.b16 %v273, %v272
  %v284 = vpack.c.b16 %v275, %v274
  %v285 = vpack.c.b16 %v277, %v276
  %v286 = vpack.c.b16 %v279, %v278
  %v287 = vpack.c.b16 %v281, %v280
  %v295 = vsel %vm89, %v238, 0
  %297 = vmatprep.subr.bf16.mxu0 0
  %298 = vmatpush1.bf16.msra.mxu0 %v282
  %299 = vmatprep.subr.bf16.mxu0 0
  %300 = vmatpush1.bf16.msra.mxu0 %v283
  %301 = vmatprep.subr.bf16.mxu0 0
  %302 = vmatpush1.bf16.msra.mxu0 %v284
  %303 = vmatprep.subr.bf16.mxu0 0
  %304 = vmatpush1.bf16.msra.mxu0 %v285
  %305 = vmatprep.subr.bf16.mxu0 0
  %306 = vmatpush1.bf16.msra.mxu0 %v286
  %307 = vmatprep.subr.bf16.mxu0 0
  %308 = vmatpush1.bf16.msra.mxu0 %v287
  %309 = vmatprep.subr.bf16.mxu0 0
  %310 = vmatpush1.bf16.msra.mxu0 0
  %311 = vmatprep.subr.bf16.mxu0 0
  %312 = vmatpush1.bf16.msra.mxu0 0
  %313 = vmatprep.subr.bf16.mxu0 0
  %314 = vmatpush1.bf16.msra.mxu0 0
  %315 = vmatprep.subr.bf16.mxu0 0
  %316 = vmatpush1.bf16.msra.mxu0 0
  %317 = vmatprep.subr.bf16.mxu0 0
  %318 = vmatpush1.bf16.msra.mxu0 0
  %319 = vmatprep.subr.bf16.mxu0 0
  %320 = vmatpush1.bf16.msra.mxu0 0
  %321 = vmatprep.subr.bf16.mxu0 0
  %322 = vmatpush1.bf16.msra.mxu0 0
  %323 = vmatprep.subr.bf16.mxu0 0
  %324 = vmatpush1.bf16.msra.mxu0 0
  %325 = vmatprep.subr.bf16.mxu0 0
  %326 = vmatpush1.bf16.msra.mxu0 0
  %327 = vmatprep.subr.bf16.mxu0 0
  %328 = vmatpush1.bf16.msra.mxu0 0
  %329 = vmatprep.mubr.bf16.mxu0 0
  %330 = vmatmul.mubr.bf16.gmra.mrb[0].mxu0 %v295
  %v331 = vpop.f32.mrb[0].mxu0
  %v332 = vadd.f32 %v256, %v331
  %v333 = vpop.f32.mrb[0].mxu0
  %v334 = vpop.f32.mrb[0].mxu0
  %v335 = vadd.f32 %v256, %v334
  %v336 = vpop.f32.mrb[0].mxu0
  %337 = vdwg.mxu0
  %338 = vst [vmem:[%s7] sm:$0xff] %v332
  %339 = vst [vmem:[%s7 + $0x8] sm:$0xff] %v335
  // Predicated region
  $region30: #{resnet_gnn_forward.11} parent=0 // pred_check
    _
  $region31: #{resnet_gnn_forward.11} parent=0 // pred_check_branch
    %341 = sbr.rel (0) target = $region33
  $region32: #{resnet_gnn_forward.11} parent=0 // pred_region
    _
  $region33: #{resnet_gnn_forward.11} parent=0 // pred_fallthru
    _
  // Predicated region
  $region34: #{resnet_gnn_forward.11} parent=0 // pred_check
    _
  $region35: #{resnet_gnn_forward.11} parent=0 // pred_check_branch
    %343 = sbr.rel (0) target = $region37
  $region36: #{resnet_gnn_forward.11} parent=0 // pred_region
    _
  $region37: #{resnet_gnn_forward.11} parent=0 // pred_fallthru
    _

// kernel: resnet_gnn_forward.9
$region0: #{resnet_gnn_forward.9}
  #allocation0 [shape = 'u32[]', space=smem, size = 0x4, offset = 0x4, fixed_abs, tag = 'smem constant byte address 0x4 - core index']
  #allocation1 [shape = 'u32[144,128]{1,0:T(1,128)}', space=vmem, size = 0x12000, scoped, tag = 'internal scratch']
  %s0 = inlined_call_operand.vmem [shape: bf16[8,8], index: 0, kind: input, shape index: {}]
  %s1 = inlined_call_operand.vmem [shape: bf16[8,32], index: 1, kind: input, shape index: {}]
  %s2 = inlined_call_operand.vmem [shape: f32[1,32], index: 2, kind: input, shape index: {}, may-alias: {2,4}]
  %s3 = inlined_call_operand.vmem [shape: bf16[32,32], index: 3, kind: input, shape index: {}]
  %s4 = inlined_call_operand.vmem [shape: f32[1,32], index: 4, kind: input, shape index: {}, may-alias: {2,4}]
  %s5 = inlined_call_operand.vmem [shape: bf16[32,128], index: 5, kind: input, shape index: {}]
  %s6 = inlined_call_operand.vmem [shape: f32[1,128], index: 6, kind: input, shape index: {}]
  %s7 = inlined_call_operand.vmem [shape: f32[8,128], index: 7, kind: output, shape index: {}]
  %s8 = sld [smem:[#allocation0]]
  $region38: #{resnet_gnn_forward.9} parent=0
    _
  %s10 = ssub.s32 1, %s8
  %s11 = scalar_select 0, %s10, %s8
  // Predicated region
  $region2: #{resnet_gnn_forward.9} parent=0 // pred_check
    _
  $region3: #{resnet_gnn_forward.9} parent=0 // pred_check_branch
    %13 = sbr.rel (0) target = $region5
  $region4: #{resnet_gnn_forward.9} parent=0 // pred_region
    _
  $region5: #{resnet_gnn_forward.9} parent=0 // pred_fallthru
    _
  // Predicated region
  $region6: #{resnet_gnn_forward.9} parent=0 // pred_check
    _
  $region7: #{resnet_gnn_forward.9} parent=0 // pred_check_branch
    %15 = sbr.rel (0) target = $region9
  $region8: #{resnet_gnn_forward.9} parent=0 // pred_region
    _
  $region9: #{resnet_gnn_forward.9} parent=0 // pred_fallthru
    _
  // Predicated region
  $region10: #{resnet_gnn_forward.9} parent=0 // pred_check
    _
  $region11: #{resnet_gnn_forward.9} parent=0 // pred_check_branch
    %17 = sbr.rel (0) target = $region13
  $region12: #{resnet_gnn_forward.9} parent=0 // pred_region
    _
  $region13: #{resnet_gnn_forward.9} parent=0 // pred_fallthru
    _
  // Predicated region
  $region14: #{resnet_gnn_forward.9} parent=0 // pred_check
    _
  $region15: #{resnet_gnn_forward.9} parent=0 // pred_check_branch
    %19 = sbr.rel (0) target = $region17
  $region16: #{resnet_gnn_forward.9} parent=0 // pred_region
    _
  $region17: #{resnet_gnn_forward.9} parent=0 // pred_fallthru
    _
  // Predicated region
  $region18: #{resnet_gnn_forward.9} parent=0 // pred_check
    _
  $region19: #{resnet_gnn_forward.9} parent=0 // pred_check_branch
    %21 = sbr.rel (0) target = $region21
  $region20: #{resnet_gnn_forward.9} parent=0 // pred_region
    _
  $region21: #{resnet_gnn_forward.9} parent=0 // pred_fallthru
    _
  // Predicated region
  $region22: #{resnet_gnn_forward.9} parent=0 // pred_check
    _
  $region23: #{resnet_gnn_forward.9} parent=0 // pred_check_branch
    %23 = sbr.rel (0) target = $region25
  $region24: #{resnet_gnn_forward.9} parent=0 // pred_region
    _
  $region25: #{resnet_gnn_forward.9} parent=0 // pred_fallthru
    _
  // Predicated region
  $region26: #{resnet_gnn_forward.9} parent=0 // pred_check
    _
  $region27: #{resnet_gnn_forward.9} parent=0 // pred_check_branch
    %25 = sbr.rel (0) target = $region29
  $region28: #{resnet_gnn_forward.9} parent=0 // pred_region
    _
  $region29: #{resnet_gnn_forward.9} parent=0 // pred_fallthru
    _
  %v27 = vld [vmem:[%s0] sm:$0xf]
  %v28 = vld [vmem:[%s1] sm:$0xf]
  %v29 = vld [vmem:[%s2] sm:$0x1]
  %v31 = vlaneseq
  %v32 = vshrl.u32 %v31, 7
  %v33 = vsub.s32 0, %v32
  %v34 = vrot.slane %v29, %v33
  %vm36 = vcmask 64512
  %v38 = vsel %vm36, %v27, 0
  %vm40 = vcmask 1043456
  %v42 = vsel %vm40, %v28, 0
  %44 = vmatprep.subr.bf16.mxu0 0
  %45 = vmatpush1.bf16.msra.mxu0 %v42
  %46 = vmatprep.subr.bf16.mxu0 0
  %47 = vmatpush1.bf16.msra.mxu0 0
  %48 = vmatprep.subr.bf16.mxu0 0
  %49 = vmatpush1.bf16.msra.mxu0 0
  %50 = vmatprep.subr.bf16.mxu0 0
  %51 = vmatpush1.bf16.msra.mxu0 0
  %52 = vmatprep.subr.bf16.mxu0 0
  %53 = vmatpush1.bf16.msra.mxu0 0
  %54 = vmatprep.subr.bf16.mxu0 0
  %55 = vmatpush1.bf16.msra.mxu0 0
  %56 = vmatprep.subr.bf16.mxu0 0
  %57 = vmatpush1.bf16.msra.mxu0 0
  %58 = vmatprep.subr.bf16.mxu0 0
  %59 = vmatpush1.bf16.msra.mxu0 0
  %60 = vmatprep.subr.bf16.mxu0 0
  %61 = vmatpush1.bf16.msra.mxu0 0
  %62 = vmatprep.subr.bf16.mxu0 0
  %63 = vmatpush1.bf16.msra.mxu0 0
  %64 = vmatprep.subr.bf16.mxu0 0
  %65 = vmatpush1.bf16.msra.mxu0 0
  %66 = vmatprep.subr.bf16.mxu0 0
  %67 = vmatpush1.bf16.msra.mxu0 0
  %68 = vmatprep.subr.bf16.mxu0 0
  %69 = vmatpush1.bf16.msra.mxu0 0
  %70 = vmatprep.subr.bf16.mxu0 0
  %71 = vmatpush1.bf16.msra.mxu0 0
  %72 = vmatprep.subr.bf16.mxu0 0
  %73 = vmatpush1.bf16.msra.mxu0 0
  %74 = vmatprep.subr.bf16.mxu0 0
  %75 = vmatpush1.bf16.msra.mxu0 0
  %76 = vmatprep.mubr.bf16.mxu0 0
  %77 = vmatmul.mubr.bf16.gmra.mrb[0].mxu0 %v38
  %v78 = vpop.f32.mrb[0].mxu0
  %v79 = vadd.f32 %v34, %v78
  %v80 = vpop.f32.mrb[0].mxu0
  %v81 = vpop.f32.mrb[0].mxu0
  %v82 = vpop.f32.mrb[0].mxu0
  %83 = vdwg.mxu0
  %v84 = vmax.f32 %v79, 0.0
  %v85 = vpack.c.bf16 %v84, %v84
  %v86 = vld [vmem:[%s3] sm:$0xf]
  %v87 = vld [vmem:[%s3 + $0x4] sm:$0xf]
  %v88 = vld [vmem:[%s3 + $0x8] sm:$0xf]
  %v89 = vld [vmem:[%s3 + $0xc] sm:$0xf]
  %v90 = vld [vmem:[%s4] sm:$0x1]
  %v92 = vlaneseq
  %v93 = vshrl.u32 %v92, 7
  %v94 = vsub.s32 0, %v93
  %v95 = vrot.slane %v90, %v94
  %v101 = vunpack.c.l.b16 %v86
  %v102 = vunpack.c.l.b16 %v87
  %v103 = vunpack.c.l.b16 %v88
  %v104 = vunpack.c.l.b16 %v89
  %v105 = vpack.c.b16 %v102, %v101
  %v106 = vpack.c.b16 %v104, %v103
  %vm109 = vcmask 261120
  %v111 = vsel %vm109, %v85, 0
  %113 = vmatprep.subr.bf16.mxu0 0
  %114 = vmatpush1.bf16.msra.mxu0 %v105
  %115 = vmatprep.subr.bf16.mxu0 0
  %116 = vmatpush1.bf16.msra.mxu0 %v106
  %117 = vmatprep.subr.bf16.mxu0 0
  %118 = vmatpush1.bf16.msra.mxu0 0
  %119 = vmatprep.subr.bf16.mxu0 0
  %120 = vmatpush1.bf16.msra.mxu0 0
  %121 = vmatprep.subr.bf16.mxu0 0
  %122 = vmatpush1.bf16.msra.mxu0 0
  %123 = vmatprep.subr.bf16.mxu0 0
  %124 = vmatpush1.bf16.msra.mxu0 0
  %125 = vmatprep.subr.bf16.mxu0 0
  %126 = vmatpush1.bf16.msra.mxu0 0
  %127 = vmatprep.subr.bf16.mxu0 0
  %128 = vmatpush1.bf16.msra.mxu0 0
  %129 = vmatprep.subr.bf16.mxu0 0
  %130 = vmatpush1.bf16.msra.mxu0 0
  %131 = vmatprep.subr.bf16.mxu0 0
  %132 = vmatpush1.bf16.msra.mxu0 0
  %133 = vmatprep.subr.bf16.mxu0 0
  %134 = vmatpush1.bf16.msra.mxu0 0
  %135 = vmatprep.subr.bf16.mxu0 0
  %136 = vmatpush1.bf16.msra.mxu0 0
  %137 = vmatprep.subr.bf16.mxu0 0
  %138 = vmatpush1.bf16.msra.mxu0 0
  %139 = vmatprep.subr.bf16.mxu0 0
  %140 = vmatpush1.bf16.msra.mxu0 0
  %141 = vmatprep.subr.bf16.mxu0 0
  %142 = vmatpush1.bf16.msra.mxu0 0
  %143 = vmatprep.subr.bf16.mxu0 0
  %144 = vmatpush1.bf16.msra.mxu0 0
  %145 = vmatprep.mubr.bf16.mxu0 0
  %146 = vmatmul.mubr.bf16.gmra.mrb[0].mxu0 %v111
  %v147 = vpop.f32.mrb[0].mxu0
  %v148 = vadd.f32 %v95, %v147
  %v149 = vpop.f32.mrb[0].mxu0
  %v150 = vpop.f32.mrb[0].mxu0
  %v151 = vpop.f32.mrb[0].mxu0
  %152 = vdwg.mxu0
  %v153 = vmax.f32 %v148, 0.0
  %v154 = vpack.c.bf16 %v153, %v153
  %v155 = vld [vmem:[%s5] sm:$0xf]
  %v156 = vld [vmem:[%s5 + $0x4] sm:$0xf]
  %v157 = vld [vmem:[%s5 + $0x8] sm:$0xf]
  %v158 = vld [vmem:[%s5 + $0xc] sm:$0xf]
  %v159 = vld [vmem:[%s6] sm:$0x1]
  %v161 = vlaneseq
  %v162 = vshrl.u32 %v161, 7
  %v163 = vsub.s32 0, %v162
  %v164 = vrot.slane %v159, %v163
  %v170 = vunpack.c.l.b16 %v155
  %v171 = vunpack.c.l.b16 %v156
  %v172 = vunpack.c.l.b16 %v157
  %v173 = vunpack.c.l.b16 %v158
  %v174 = vpack.c.b16 %v171, %v170
  %v175 = vpack.c.b16 %v173, %v172
  %v179 = vsel %vm109, %v154, 0
  %181 = vmatprep.subr.bf16.mxu0 0
  %182 = vmatpush1.bf16.msra.mxu0 %v174
  %183 = vmatprep.subr.bf16.mxu0 0
  %184 = vmatpush1.bf16.msra.mxu0 %v175
  %185 = vmatprep.subr.bf16.mxu0 0
  %186 = vmatpush1.bf16.msra.mxu0 0
  %187 = vmatprep.subr.bf16.mxu0 0
  %188 = vmatpush1.bf16.msra.mxu0 0
  %189 = vmatprep.subr.bf16.mxu0 0
  %190 = vmatpush1.bf16.msra.mxu0 0
  %191 = vmatprep.subr.bf16.mxu0 0
  %192 = vmatpush1.bf16.msra.mxu0 0
  %193 = vmatprep.subr.bf16.mxu0 0
  %194 = vmatpush1.bf16.msra.mxu0 0
  %195 = vmatprep.subr.bf16.mxu0 0
  %196 = vmatpush1.bf16.msra.mxu0 0
  %197 = vmatprep.subr.bf16.mxu0 0
  %198 = vmatpush1.bf16.msra.mxu0 0
  %199 = vmatprep.subr.bf16.mxu0 0
  %200 = vmatpush1.bf16.msra.mxu0 0
  %201 = vmatprep.subr.bf16.mxu0 0
  %202 = vmatpush1.bf16.msra.mxu0 0
  %203 = vmatprep.subr.bf16.mxu0 0
  %204 = vmatpush1.bf16.msra.mxu0 0
  %205 = vmatprep.subr.bf16.mxu0 0
  %206 = vmatpush1.bf16.msra.mxu0 0
  %207 = vmatprep.subr.bf16.mxu0 0
  %208 = vmatpush1.bf16.msra.mxu0 0
  %209 = vmatprep.subr.bf16.mxu0 0
  %210 = vmatpush1.bf16.msra.mxu0 0
  %211 = vmatprep.subr.bf16.mxu0 0
  %212 = vmatpush1.bf16.msra.mxu0 0
  %213 = vmatprep.mubr.bf16.mxu0 0
  %214 = vmatmul.mubr.bf16.gmra.mrb[0].mxu0 %v179
  %v215 = vpop.f32.mrb[0].mxu0
  %v216 = vadd.f32 %v164, %v215
  %v217 = vpop.f32.mrb[0].mxu0
  %v218 = vpop.f32.mrb[0].mxu0
  %v219 = vpop.f32.mrb[0].mxu0
  %220 = vdwg.mxu0
  %221 = vst [vmem:[%s7] sm:$0xff] %v216
  // Predicated region
  $region30: #{resnet_gnn_forward.9} parent=0 // pred_check
    _
  $region31: #{resnet_gnn_forward.9} parent=0 // pred_check_branch
    %223 = sbr.rel (0) target = $region33
  $region32: #{resnet_gnn_forward.9} parent=0 // pred_region
    _
  $region33: #{resnet_gnn_forward.9} parent=0 // pred_fallthru
    _
  // Predicated region
  $region34: #{resnet_gnn_forward.9} parent=0 // pred_check
    _
  $region35: #{resnet_gnn_forward.9} parent=0 // pred_check_branch
    %225 = sbr.rel (0) target = $region37
  $region36: #{resnet_gnn_forward.9} parent=0 // pred_region
    _
  $region37: #{resnet_gnn_forward.9} parent=0 // pred_fallthru
    _

// kernel: resnet_gnn_forward.12
$region0: #{resnet_gnn_forward.12}
  #allocation0 [shape = 'u32[]', space=smem, size = 0x4, offset = 0x4, fixed_abs, tag = 'smem constant byte address 0x4 - core index']
  #allocation1 [shape = 'u32[144,128]{1,0:T(1,128)}', space=vmem, size = 0x12000, scoped, tag = 'internal scratch']
  #allocation2 [shape = 'f32[8,32]{1,0:T(8,128)}', space=vmem, size = 0x1000, scoped, tag = 'scratch operand']
  %s0 = inlined_call_operand.vmem [shape: s32[1,16], index: 0, kind: input, shape index: {}]
  %s1 = inlined_call_operand.vmem [shape: bf16[16,32], index: 1, kind: input, shape index: {}]
  %s2 = inlined_call_operand.vmem [shape: f32[8,32], index: 2, kind: output, shape index: {}]
  %s3 = sld [smem:[#allocation0]]
  $region26: #{resnet_gnn_forward.12} parent=0
    _
  %s5 = ssub.s32 1, %s3
  %s6 = scalar_select 0, %s5, %s3
  // Predicated region
  $region2: #{resnet_gnn_forward.12} parent=0 // pred_check
    _
  $region3: #{resnet_gnn_forward.12} parent=0 // pred_check_branch
    %8 = sbr.rel (0) target = $region5
  $region4: #{resnet_gnn_forward.12} parent=0 // pred_region
    _
  $region5: #{resnet_gnn_forward.12} parent=0 // pred_fallthru
    _
  // Predicated region
  $region6: #{resnet_gnn_forward.12} parent=0 // pred_check
    _
  $region7: #{resnet_gnn_forward.12} parent=0 // pred_check_branch
    %10 = sbr.rel (0) target = $region9
  $region8: #{resnet_gnn_forward.12} parent=0 // pred_region
    _
  $region9: #{resnet_gnn_forward.12} parent=0 // pred_fallthru
    _
  %p12 = scmp.eq.s32.totalorder 0, 0
  // Predicated region
  $region10: #{resnet_gnn_forward.12} parent=0 // pred_check
    %p13 = pneg %p12
  $region11: #{resnet_gnn_forward.12} parent=0 // pred_check_branch
    %15 = sbr.rel (%p13) target = $region13
  $region12: #{resnet_gnn_forward.12} parent=0 // pred_region
    %vm16 = vcmask 261120
    %17 = vst.msk [vmem:[#allocation2] sm:$0xff] %vm16, 0.0
  $region13: #{resnet_gnn_forward.12} parent=0 // pred_fallthru
    _
  %s18 = smul.u32 0, 8
  %v19 = vlaneseq
  %v20 = vshrl.u32 %v19, 7
  %v21 = vstv %s18
  %v22 = vadd.s32 %v20, %v21
  %v23 = vld [vmem:[%s0] sm:$0x1]
  %v24 = vlaneseq
  %v25 = vshrl.u32 %v24, 7
  %v26 = vsub.s32 0, %v25
  %v27 = vrot.slane %v23, %v26
  %vm28 = vcmp.eq.s32.totalorder %v22, %v27
  %v29 = vsel %vm28, 1, 0
  %v30 = vcvt.s32.f32 %v29
  %v31 = vpack.c.bf16 %v30, %v30
  %v32 = vld [vmem:[#allocation2] sm:$0xff]
  %v33 = vld [vmem:[%s1] sm:$0xf]
  %v34 = vld [vmem:[%s1 + $0x4] sm:$0xf]
  %v37 = vunpack.c.l.b16 %v33
  %v38 = vunpack.c.l.b16 %v34
  %v39 = vpack.c.b16 %v38, %v37
  %vm41 = vcmask 130048
  %v43 = vsel %vm41, %v31, 0
  %45 = vmatprep.subr.bf16.mxu0 0
  %46 = vmatpush1.bf16.msra.mxu0 %v39
  %47 = vmatprep.subr.bf16.mxu0 0
  %48 = vmatpush1.bf16.msra.mxu0 0
  %49 = vmatprep.subr.bf16.mxu0 0
  %50 = vmatpush1.bf16.msra.mxu0 0
  %51 = vmatprep.subr.bf16.mxu0 0
  %52 = vmatpush1.bf16.msra.mxu0 0
  %53 = vmatprep.subr.bf16.mxu0 0
  %54 = vmatpush1.bf16.msra.mxu0 0
  %55 = vmatprep.subr.bf16.mxu0 0
  %56 = vmatpush1.bf16.msra.mxu0 0
  %57 = vmatprep.subr.bf16.mxu0 0
  %58 = vmatpush1.bf16.msra.mxu0 0
  %59 = vmatprep.subr.bf16.mxu0 0
  %60 = vmatpush1.bf16.msra.mxu0 0
  %61 = vmatprep.subr.bf16.mxu0 0
  %62 = vmatpush1.bf16.msra.mxu0 0
  %63 = vmatprep.subr.bf16.mxu0 0
  %64 = vmatpush1.bf16.msra.mxu0 0
  %65 = vmatprep.subr.bf16.mxu0 0
  %66 = vmatpush1.bf16.msra.mxu0 0
  %67 = vmatprep.subr.bf16.mxu0 0
  %68 = vmatpush1.bf16.msra.mxu0 0
  %69 = vmatprep.subr.bf16.mxu0 0
  %70 = vmatpush1.bf16.msra.mxu0 0
  %71 = vmatprep.subr.bf16.mxu0 0
  %72 = vmatpush1.bf16.msra.mxu0 0
  %73 = vmatprep.subr.bf16.mxu0 0
  %74 = vmatpush1.bf16.msra.mxu0 0
  %75 = vmatprep.subr.bf16.mxu0 0
  %76 = vmatpush1.bf16.msra.mxu0 0
  %77 = vmatprep.mubr.bf16.mxu0 0
  %78 = vmatmul.mubr.bf16.gmra.mrb[0].mxu0 %v43
  %v79 = vpop.f32.mrb[0].mxu0
  %v80 = vadd.f32 0.0, %v79
  %v81 = vpop.f32.mrb[0].mxu0
  %v82 = vpop.f32.mrb[0].mxu0
  %v83 = vpop.f32.mrb[0].mxu0
  %84 = vdwg.mxu0
  %v85 = vadd.f32 %v32, %v80
  %vm86 = vcmask 261120
  %87 = vst.msk [vmem:[#allocation2] sm:$0xff] %vm86, %v85
  // Predicated region
  $region14: #{resnet_gnn_forward.12} parent=0 // pred_check
    %p88 = pneg %p12
  $region15: #{resnet_gnn_forward.12} parent=0 // pred_check_branch
    %90 = sbr.rel (%p88) target = $region17
  $region16: #{resnet_gnn_forward.12} parent=0 // pred_region
    %v91 = vld [vmem:[#allocation2] sm:$0xff]
    %92 = vst.msk [vmem:[%s2] sm:$0xff] %vm86, %v91
  $region17: #{resnet_gnn_forward.12} parent=0 // pred_fallthru
    _
  // Predicated region
  $region18: #{resnet_gnn_forward.12} parent=0 // pred_check
    _
  $region19: #{resnet_gnn_forward.12} parent=0 // pred_check_branch
    %94 = sbr.rel (0) target = $region21
  $region20: #{resnet_gnn_forward.12} parent=0 // pred_region
    _
  $region21: #{resnet_gnn_forward.12} parent=0 // pred_fallthru
    _
  // Predicated region
  $region22: #{resnet_gnn_forward.12} parent=0 // pred_check
    _
  $region23: #{resnet_gnn_forward.12} parent=0 // pred_check_branch
    %96 = sbr.rel (0) target = $region25
  $region24: #{resnet_gnn_forward.12} parent=0 // pred_region
    _
  $region25: #{resnet_gnn_forward.12} parent=0 // pred_fallthru
    _

// kernel: resnet_gnn_forward.13
$region0: #{resnet_gnn_forward.13}
  #allocation0 [shape = 'u32[]', space=smem, size = 0x4, offset = 0x4, fixed_abs, tag = 'smem constant byte address 0x4 - core index']
  #allocation1 [shape = 'u32[144,128]{1,0:T(1,128)}', space=vmem, size = 0x12000, scoped, tag = 'internal scratch']
  %s0 = inlined_call_operand.vmem [shape: bf16[8,64], index: 0, kind: input, shape index: {}]
  %s1 = inlined_call_operand.vmem [shape: bf16[64,64], index: 1, kind: input, shape index: {}]
  %s2 = inlined_call_operand.vmem [shape: f32[1,64], index: 2, kind: input, shape index: {}, may-alias: {2,4}]
  %s3 = inlined_call_operand.vmem [shape: bf16[64,64], index: 3, kind: input, shape index: {}]
  %s4 = inlined_call_operand.vmem [shape: f32[1,64], index: 4, kind: input, shape index: {}, may-alias: {2,4}]
  %s5 = inlined_call_operand.vmem [shape: bf16[64,128], index: 5, kind: input, shape index: {}]
  %s6 = inlined_call_operand.vmem [shape: f32[1,128], index: 6, kind: input, shape index: {}]
  %s7 = inlined_call_operand.vmem [shape: f32[8,128], index: 7, kind: output, shape index: {}]
  %s8 = sld [smem:[#allocation0]]
  $region38: #{resnet_gnn_forward.13} parent=0
    _
  %s10 = ssub.s32 1, %s8
  %s11 = scalar_select 0, %s10, %s8
  // Predicated region
  $region2: #{resnet_gnn_forward.13} parent=0 // pred_check
    _
  $region3: #{resnet_gnn_forward.13} parent=0 // pred_check_branch
    %13 = sbr.rel (0) target = $region5
  $region4: #{resnet_gnn_forward.13} parent=0 // pred_region
    _
  $region5: #{resnet_gnn_forward.13} parent=0 // pred_fallthru
    _
  // Predicated region
  $region6: #{resnet_gnn_forward.13} parent=0 // pred_check
    _
  $region7: #{resnet_gnn_forward.13} parent=0 // pred_check_branch
    %15 = sbr.rel (0) target = $region9
  $region8: #{resnet_gnn_forward.13} parent=0 // pred_region
    _
  $region9: #{resnet_gnn_forward.13} parent=0 // pred_fallthru
    _
  // Predicated region
  $region10: #{resnet_gnn_forward.13} parent=0 // pred_check
    _
  $region11: #{resnet_gnn_forward.13} parent=0 // pred_check_branch
    %17 = sbr.rel (0) target = $region13
  $region12: #{resnet_gnn_forward.13} parent=0 // pred_region
    _
  $region13: #{resnet_gnn_forward.13} parent=0 // pred_fallthru
    _
  // Predicated region
  $region14: #{resnet_gnn_forward.13} parent=0 // pred_check
    _
  $region15: #{resnet_gnn_forward.13} parent=0 // pred_check_branch
    %19 = sbr.rel (0) target = $region17
  $region16: #{resnet_gnn_forward.13} parent=0 // pred_region
    _
  $region17: #{resnet_gnn_forward.13} parent=0 // pred_fallthru
    _
  // Predicated region
  $region18: #{resnet_gnn_forward.13} parent=0 // pred_check
    _
  $region19: #{resnet_gnn_forward.13} parent=0 // pred_check_branch
    %21 = sbr.rel (0) target = $region21
  $region20: #{resnet_gnn_forward.13} parent=0 // pred_region
    _
  $region21: #{resnet_gnn_forward.13} parent=0 // pred_fallthru
    _
  // Predicated region
  $region22: #{resnet_gnn_forward.13} parent=0 // pred_check
    _
  $region23: #{resnet_gnn_forward.13} parent=0 // pred_check_branch
    %23 = sbr.rel (0) target = $region25
  $region24: #{resnet_gnn_forward.13} parent=0 // pred_region
    _
  $region25: #{resnet_gnn_forward.13} parent=0 // pred_fallthru
    _
  // Predicated region
  $region26: #{resnet_gnn_forward.13} parent=0 // pred_check
    _
  $region27: #{resnet_gnn_forward.13} parent=0 // pred_check_branch
    %25 = sbr.rel (0) target = $region29
  $region28: #{resnet_gnn_forward.13} parent=0 // pred_region
    _
  $region29: #{resnet_gnn_forward.13} parent=0 // pred_fallthru
    _
  %v27 = vld [vmem:[%s0] sm:$0xf]
  %v28 = vld [vmem:[%s1] sm:$0xf]
  %v29 = vld [vmem:[%s1 + $0x4] sm:$0xf]
  %v30 = vld [vmem:[%s1 + $0x8] sm:$0xf]
  %v31 = vld [vmem:[%s1 + $0xc] sm:$0xf]
  %v32 = vld [vmem:[%s1 + $0x10] sm:$0xf]
  %v33 = vld [vmem:[%s1 + $0x14] sm:$0xf]
  %v34 = vld [vmem:[%s1 + $0x18] sm:$0xf]
  %v35 = vld [vmem:[%s1 + $0x1c] sm:$0xf]
  %v36 = vld [vmem:[%s2] sm:$0x1]
  %v38 = vlaneseq
  %v39 = vshrl.u32 %v38, 7
  %v40 = vsub.s32 0, %v39
  %v41 = vrot.slane %v36, %v40
  %v51 = vunpack.c.l.b16 %v28
  %v52 = vunpack.c.l.b16 %v29
  %v53 = vunpack.c.l.b16 %v30
  %v54 = vunpack.c.l.b16 %v31
  %v55 = vunpack.c.l.b16 %v32
  %v56 = vunpack.c.l.b16 %v33
  %v57 = vunpack.c.l.b16 %v34
  %v58 = vunpack.c.l.b16 %v35
  %v59 = vpack.c.b16 %v52, %v51
  %v60 = vpack.c.b16 %v54, %v53
  %v61 = vpack.c.b16 %v56, %v55
  %v62 = vpack.c.b16 %v58, %v57
  %vm67 = vcmask 523264
  %v69 = vsel %vm67, %v27, 0
  %71 = vmatprep.subr.bf16.mxu0 0
  %72 = vmatpush1.bf16.msra.mxu0 %v59
  %73 = vmatprep.subr.bf16.mxu0 0
  %74 = vmatpush1.bf16.msra.mxu0 %v60
  %75 = vmatprep.subr.bf16.mxu0 0
  %76 = vmatpush1.bf16.msra.mxu0 %v61
  %77 = vmatprep.subr.bf16.mxu0 0
  %78 = vmatpush1.bf16.msra.mxu0 %v62
  %79 = vmatprep.subr.bf16.mxu0 0
  %80 = vmatpush1.bf16.msra.mxu0 0
  %81 = vmatprep.subr.bf16.mxu0 0
  %82 = vmatpush1.bf16.msra.mxu0 0
  %83 = vmatprep.subr.bf16.mxu0 0
  %84 = vmatpush1.bf16.msra.mxu0 0
  %85 = vmatprep.subr.bf16.mxu0 0
  %86 = vmatpush1.bf16.msra.mxu0 0
  %87 = vmatprep.subr.bf16.mxu0 0
  %88 = vmatpush1.bf16.msra.mxu0 0
  %89 = vmatprep.subr.bf16.mxu0 0
  %90 = vmatpush1.bf16.msra.mxu0 0
  %91 = vmatprep.subr.bf16.mxu0 0
  %92 = vmatpush1.bf16.msra.mxu0 0
  %93 = vmatprep.subr.bf16.mxu0 0
  %94 = vmatpush1.bf16.msra.mxu0 0
  %95 = vmatprep.subr.bf16.mxu0 0
  %96 = vmatpush1.bf16.msra.mxu0 0
  %97 = vmatprep.subr.bf16.mxu0 0
  %98 = vmatpush1.bf16.msra.mxu0 0
  %99 = vmatprep.subr.bf16.mxu0 0
  %100 = vmatpush1.bf16.msra.mxu0 0
  %101 = vmatprep.subr.bf16.mxu0 0
  %102 = vmatpush1.bf16.msra.mxu0 0
  %103 = vmatprep.mubr.bf16.mxu0 0
  %104 = vmatmul.mubr.bf16.gmra.mrb[0].mxu0 %v69
  %v105 = vpop.f32.mrb[0].mxu0
  %v106 = vadd.f32 %v41, %v105
  %v107 = vpop.f32.mrb[0].mxu0
  %v108 = vpop.f32.mrb[0].mxu0
  %v109 = vpop.f32.mrb[0].mxu0
  %110 = vdwg.mxu0
  %v111 = vmax.f32 %v106, 0.0
  %v112 = vpack.c.bf16 %v111, %v111
  %v113 = vld [vmem:[%s3] sm:$0xf]
  %v114 = vld [vmem:[%s3 + $0x4] sm:$0xf]
  %v115 = vld [vmem:[%s3 + $0x8] sm:$0xf]
  %v116 = vld [vmem:[%s3 + $0xc] sm:$0xf]
  %v117 = vld [vmem:[%s3 + $0x10] sm:$0xf]
  %v118 = vld [vmem:[%s3 + $0x14] sm:$0xf]
  %v119 = vld [vmem:[%s3 + $0x18] sm:$0xf]
  %v120 = vld [vmem:[%s3 + $0x1c] sm:$0xf]
  %v121 = vld [vmem:[%s4] sm:$0x1]
  %v123 = vlaneseq
  %v124 = vshrl.u32 %v123, 7
  %v125 = vsub.s32 0, %v124
  %v126 = vrot.slane %v121, %v125
  %v136 = vunpack.c.l.b16 %v113
  %v137 = vunpack.c.l.b16 %v114
  %v138 = vunpack.c.l.b16 %v115
  %v139 = vunpack.c.l.b16 %v116
  %v140 = vunpack.c.l.b16 %v117
  %v141 = vunpack.c.l.b16 %v118
  %v142 = vunpack.c.l.b16 %v119
  %v143 = vunpack.c.l.b16 %v120
  %v144 = vpack.c.b16 %v137, %v136
  %v145 = vpack.c.b16 %v139, %v138
  %v146 = vpack.c.b16 %v141, %v140
  %v147 = vpack.c.b16 %v143, %v142
  %v153 = vsel %vm67, %v112, 0
  %155 = vmatprep.subr.bf16.mxu0 0
  %156 = vmatpush1.bf16.msra.mxu0 %v144
  %157 = vmatprep.subr.bf16.mxu0 0
  %158 = vmatpush1.bf16.msra.mxu0 %v145
  %159 = vmatprep.subr.bf16.mxu0 0
  %160 = vmatpush1.bf16.msra.mxu0 %v146
  %161 = vmatprep.subr.bf16.mxu0 0
  %162 = vmatpush1.bf16.msra.mxu0 %v147
  %163 = vmatprep.subr.bf16.mxu0 0
  %164 = vmatpush1.bf16.msra.mxu0 0
  %165 = vmatprep.subr.bf16.mxu0 0
  %166 = vmatpush1.bf16.msra.mxu0 0
  %167 = vmatprep.subr.bf16.mxu0 0
  %168 = vmatpush1.bf16.msra.mxu0 0
  %169 = vmatprep.subr.bf16.mxu0 0
  %170 = vmatpush1.bf16.msra.mxu0 0
  %171 = vmatprep.subr.bf16.mxu0 0
  %172 = vmatpush1.bf16.msra.mxu0 0
  %173 = vmatprep.subr.bf16.mxu0 0
  %174 = vmatpush1.bf16.msra.mxu0 0
  %175 = vmatprep.subr.bf16.mxu0 0
  %176 = vmatpush1.bf16.msra.mxu0 0
  %177 = vmatprep.subr.bf16.mxu0 0
  %178 = vmatpush1.bf16.msra.mxu0 0
  %179 = vmatprep.subr.bf16.mxu0 0
  %180 = vmatpush1.bf16.msra.mxu0 0
  %181 = vmatprep.subr.bf16.mxu0 0
  %182 = vmatpush1.bf16.msra.mxu0 0
  %183 = vmatprep.subr.bf16.mxu0 0
  %184 = vmatpush1.bf16.msra.mxu0 0
  %185 = vmatprep.subr.bf16.mxu0 0
  %186 = vmatpush1.bf16.msra.mxu0 0
  %187 = vmatprep.mubr.bf16.mxu0 0
  %188 = vmatmul.mubr.bf16.gmra.mrb[0].mxu0 %v153
  %v189 = vpop.f32.mrb[0].mxu0
  %v190 = vadd.f32 %v126, %v189
  %v191 = vpop.f32.mrb[0].mxu0
  %v192 = vpop.f32.mrb[0].mxu0
  %v193 = vpop.f32.mrb[0].mxu0
  %194 = vdwg.mxu0
  %v195 = vmax.f32 %v190, 0.0
  %v196 = vpack.c.bf16 %v195, %v195
  %v197 = vld [vmem:[%s5] sm:$0xf]
  %v198 = vld [vmem:[%s5 + $0x4] sm:$0xf]
  %v199 = vld [vmem:[%s5 + $0x8] sm:$0xf]
  %v200 = vld [vmem:[%s5 + $0xc] sm:$0xf]
  %v201 = vld [vmem:[%s5 + $0x10] sm:$0xf]
  %v202 = vld [vmem:[%s5 + $0x14] sm:$0xf]
  %v203 = vld [vmem:[%s5 + $0x18] sm:$0xf]
  %v204 = vld [vmem:[%s5 + $0x1c] sm:$0xf]
  %v205 = vld [vmem:[%s6] sm:$0x1]
  %v207 = vlaneseq
  %v208 = vshrl.u32 %v207, 7
  %v209 = vsub.s32 0, %v208
  %v210 = vrot.slane %v205, %v209
  %v220 = vunpack.c.l.b16 %v197
  %v221 = vunpack.c.l.b16 %v198
  %v222 = vunpack.c.l.b16 %v199
  %v223 = vunpack.c.l.b16 %v200
  %v224 = vunpack.c.l.b16 %v201
  %v225 = vunpack.c.l.b16 %v202
  %v226 = vunpack.c.l.b16 %v203
  %v227 = vunpack.c.l.b16 %v204
  %v228 = vpack.c.b16 %v221, %v220
  %v229 = vpack.c.b16 %v223, %v222
  %v230 = vpack.c.b16 %v225, %v224
  %v231 = vpack.c.b16 %v227, %v226
  %v237 = vsel %vm67, %v196, 0
  %239 = vmatprep.subr.bf16.mxu0 0
  %240 = vmatpush1.bf16.msra.mxu0 %v228
  %241 = vmatprep.subr.bf16.mxu0 0
  %242 = vmatpush1.bf16.msra.mxu0 %v229
  %243 = vmatprep.subr.bf16.mxu0 0
  %244 = vmatpush1.bf16.msra.mxu0 %v230
  %245 = vmatprep.subr.bf16.mxu0 0
  %246 = vmatpush1.bf16.msra.mxu0 %v231
  %247 = vmatprep.subr.bf16.mxu0 0
  %248 = vmatpush1.bf16.msra.mxu0 0
  %249 = vmatprep.subr.bf16.mxu0 0
  %250 = vmatpush1.bf16.msra.mxu0 0
  %251 = vmatprep.subr.bf16.mxu0 0
  %252 = vmatpush1.bf16.msra.mxu0 0
  %253 = vmatprep.subr.bf16.mxu0 0
  %254 = vmatpush1.bf16.msra.mxu0 0
  %255 = vmatprep.subr.bf16.mxu0 0
  %256 = vmatpush1.bf16.msra.mxu0 0
  %257 = vmatprep.subr.bf16.mxu0 0
  %258 = vmatpush1.bf16.msra.mxu0 0
  %259 = vmatprep.subr.bf16.mxu0 0
  %260 = vmatpush1.bf16.msra.mxu0 0
  %261 = vmatprep.subr.bf16.mxu0 0
  %262 = vmatpush1.bf16.msra.mxu0 0
  %263 = vmatprep.subr.bf16.mxu0 0
  %264 = vmatpush1.bf16.msra.mxu0 0
  %265 = vmatprep.subr.bf16.mxu0 0
  %266 = vmatpush1.bf16.msra.mxu0 0
  %267 = vmatprep.subr.bf16.mxu0 0
  %268 = vmatpush1.bf16.msra.mxu0 0
  %269 = vmatprep.subr.bf16.mxu0 0
  %270 = vmatpush1.bf16.msra.mxu0 0
  %271 = vmatprep.mubr.bf16.mxu0 0
  %272 = vmatmul.mubr.bf16.gmra.mrb[0].mxu0 %v237
  %v273 = vpop.f32.mrb[0].mxu0
  %v274 = vadd.f32 %v210, %v273
  %v275 = vpop.f32.mrb[0].mxu0
  %v276 = vpop.f32.mrb[0].mxu0
  %v277 = vpop.f32.mrb[0].mxu0
  %278 = vdwg.mxu0
  %279 = vst [vmem:[%s7] sm:$0xff] %v274
  // Predicated region
  $region30: #{resnet_gnn_forward.13} parent=0 // pred_check
    _
  $region31: #{resnet_gnn_forward.13} parent=0 // pred_check_branch
    %281 = sbr.rel (0) target = $region33
  $region32: #{resnet_gnn_forward.13} parent=0 // pred_region
    _
  $region33: #{resnet_gnn_forward.13} parent=0 // pred_fallthru
    _
  // Predicated region
  $region34: #{resnet_gnn_forward.13} parent=0 // pred_check
    _
  $region35: #{resnet_gnn_forward.13} parent=0 // pred_check_branch
    %283 = sbr.rel (0) target = $region37
  $region36: #{resnet_gnn_forward.13} parent=0 // pred_region
    _
  $region37: #{resnet_gnn_forward.13} parent=0 // pred_fallthru
    _

// kernel: resnet_gnn_forward.17
$region0: #{resnet_gnn_forward.17}
  #allocation0 [shape = 'u32[]', space=smem, size = 0x4, offset = 0x4, fixed_abs, tag = 'smem constant byte address 0x4 - core index']
  #allocation1 [shape = 'u32[144,128]{1,0:T(1,128)}', space=vmem, size = 0x12000, scoped, tag = 'internal scratch']
  %s0 = inlined_call_operand.vmem [shape: bf16[8,32], index: 0, kind: input, shape index: {}]
  %s1 = inlined_call_operand.vmem [shape: bf16[32,32], index: 1, kind: input, shape index: {}]
  %s2 = inlined_call_operand.vmem [shape: f32[1,32], index: 2, kind: input, shape index: {}, may-alias: {2,4}]
  %s3 = inlined_call_operand.vmem [shape: bf16[32,32], index: 3, kind: input, shape index: {}]
  %s4 = inlined_call_operand.vmem [shape: f32[1,32], index: 4, kind: input, shape index: {}, may-alias: {2,4}]
  %s5 = inlined_call_operand.vmem [shape: bf16[32,128], index: 5, kind: input, shape index: {}]
  %s6 = inlined_call_operand.vmem [shape: f32[1,128], index: 6, kind: input, shape index: {}]
  %s7 = inlined_call_operand.vmem [shape: f32[8,128], index: 7, kind: output, shape index: {}]
  %s8 = sld [smem:[#allocation0]]
  $region38: #{resnet_gnn_forward.17} parent=0
    _
  %s10 = ssub.s32 1, %s8
  %s11 = scalar_select 0, %s10, %s8
  // Predicated region
  $region2: #{resnet_gnn_forward.17} parent=0 // pred_check
    _
  $region3: #{resnet_gnn_forward.17} parent=0 // pred_check_branch
    %13 = sbr.rel (0) target = $region5
  $region4: #{resnet_gnn_forward.17} parent=0 // pred_region
    _
  $region5: #{resnet_gnn_forward.17} parent=0 // pred_fallthru
    _
  // Predicated region
  $region6: #{resnet_gnn_forward.17} parent=0 // pred_check
    _
  $region7: #{resnet_gnn_forward.17} parent=0 // pred_check_branch
    %15 = sbr.rel (0) target = $region9
  $region8: #{resnet_gnn_forward.17} parent=0 // pred_region
    _
  $region9: #{resnet_gnn_forward.17} parent=0 // pred_fallthru
    _
  // Predicated region
  $region10: #{resnet_gnn_forward.17} parent=0 // pred_check
    _
  $region11: #{resnet_gnn_forward.17} parent=0 // pred_check_branch
    %17 = sbr.rel (0) target = $region13
  $region12: #{resnet_gnn_forward.17} parent=0 // pred_region
    _
  $region13: #{resnet_gnn_forward.17} parent=0 // pred_fallthru
    _
  // Predicated region
  $region14: #{resnet_gnn_forward.17} parent=0 // pred_check
    _
  $region15: #{resnet_gnn_forward.17} parent=0 // pred_check_branch
    %19 = sbr.rel (0) target = $region17
  $region16: #{resnet_gnn_forward.17} parent=0 // pred_region
    _
  $region17: #{resnet_gnn_forward.17} parent=0 // pred_fallthru
    _
  // Predicated region
  $region18: #{resnet_gnn_forward.17} parent=0 // pred_check
    _
  $region19: #{resnet_gnn_forward.17} parent=0 // pred_check_branch
    %21 = sbr.rel (0) target = $region21
  $region20: #{resnet_gnn_forward.17} parent=0 // pred_region
    _
  $region21: #{resnet_gnn_forward.17} parent=0 // pred_fallthru
    _
  // Predicated region
  $region22: #{resnet_gnn_forward.17} parent=0 // pred_check
    _
  $region23: #{resnet_gnn_forward.17} parent=0 // pred_check_branch
    %23 = sbr.rel (0) target = $region25
  $region24: #{resnet_gnn_forward.17} parent=0 // pred_region
    _
  $region25: #{resnet_gnn_forward.17} parent=0 // pred_fallthru
    _
  // Predicated region
  $region26: #{resnet_gnn_forward.17} parent=0 // pred_check
    _
  $region27: #{resnet_gnn_forward.17} parent=0 // pred_check_branch
    %25 = sbr.rel (0) target = $region29
  $region28: #{resnet_gnn_forward.17} parent=0 // pred_region
    _
  $region29: #{resnet_gnn_forward.17} parent=0 // pred_fallthru
    _
  %v27 = vld [vmem:[%s0] sm:$0xf]
  %v28 = vld [vmem:[%s1] sm:$0xf]
  %v29 = vld [vmem:[%s1 + $0x4] sm:$0xf]
  %v30 = vld [vmem:[%s1 + $0x8] sm:$0xf]
  %v31 = vld [vmem:[%s1 + $0xc] sm:$0xf]
  %v32 = vld [vmem:[%s2] sm:$0x1]
  %v34 = vlaneseq
  %v35 = vshrl.u32 %v34, 7
  %v36 = vsub.s32 0, %v35
  %v37 = vrot.slane %v32, %v36
  %v43 = vunpack.c.l.b16 %v28
  %v44 = vunpack.c.l.b16 %v29
  %v45 = vunpack.c.l.b16 %v30
  %v46 = vunpack.c.l.b16 %v31
  %v47 = vpack.c.b16 %v44, %v43
  %v48 = vpack.c.b16 %v46, %v45
  %vm51 = vcmask 261120
  %v53 = vsel %vm51, %v27, 0
  %55 = vmatprep.subr.bf16.mxu0 0
  %56 = vmatpush1.bf16.msra.mxu0 %v47
  %57 = vmatprep.subr.bf16.mxu0 0
  %58 = vmatpush1.bf16.msra.mxu0 %v48
  %59 = vmatprep.subr.bf16.mxu0 0
  %60 = vmatpush1.bf16.msra.mxu0 0
  %61 = vmatprep.subr.bf16.mxu0 0
  %62 = vmatpush1.bf16.msra.mxu0 0
  %63 = vmatprep.subr.bf16.mxu0 0
  %64 = vmatpush1.bf16.msra.mxu0 0
  %65 = vmatprep.subr.bf16.mxu0 0
  %66 = vmatpush1.bf16.msra.mxu0 0
  %67 = vmatprep.subr.bf16.mxu0 0
  %68 = vmatpush1.bf16.msra.mxu0 0
  %69 = vmatprep.subr.bf16.mxu0 0
  %70 = vmatpush1.bf16.msra.mxu0 0
  %71 = vmatprep.subr.bf16.mxu0 0
  %72 = vmatpush1.bf16.msra.mxu0 0
  %73 = vmatprep.subr.bf16.mxu0 0
  %74 = vmatpush1.bf16.msra.mxu0 0
  %75 = vmatprep.subr.bf16.mxu0 0
  %76 = vmatpush1.bf16.msra.mxu0 0
  %77 = vmatprep.subr.bf16.mxu0 0
  %78 = vmatpush1.bf16.msra.mxu0 0
  %79 = vmatprep.subr.bf16.mxu0 0
  %80 = vmatpush1.bf16.msra.mxu0 0
  %81 = vmatprep.subr.bf16.mxu0 0
  %82 = vmatpush1.bf16.msra.mxu0 0
  %83 = vmatprep.subr.bf16.mxu0 0
  %84 = vmatpush1.bf16.msra.mxu0 0
  %85 = vmatprep.subr.bf16.mxu0 0
  %86 = vmatpush1.bf16.msra.mxu0 0
  %87 = vmatprep.mubr.bf16.mxu0 0
  %88 = vmatmul.mubr.bf16.gmra.mrb[0].mxu0 %v53
  %v89 = vpop.f32.mrb[0].mxu0
  %v90 = vadd.f32 %v37, %v89
  %v91 = vpop.f32.mrb[0].mxu0
  %v92 = vpop.f32.mrb[0].mxu0
  %v93 = vpop.f32.mrb[0].mxu0
  %94 = vdwg.mxu0
  %v95 = vmax.f32 %v90, 0.0
  %v96 = vpack.c.bf16 %v95, %v95
  %v97 = vld [vmem:[%s3] sm:$0xf]
  %v98 = vld [vmem:[%s3 + $0x4] sm:$0xf]
  %v99 = vld [vmem:[%s3 + $0x8] sm:$0xf]
  %v100 = vld [vmem:[%s3 + $0xc] sm:$0xf]
  %v101 = vld [vmem:[%s4] sm:$0x1]
  %v103 = vlaneseq
  %v104 = vshrl.u32 %v103, 7
  %v105 = vsub.s32 0, %v104
  %v106 = vrot.slane %v101, %v105
  %v112 = vunpack.c.l.b16 %v97
  %v113 = vunpack.c.l.b16 %v98
  %v114 = vunpack.c.l.b16 %v99
  %v115 = vunpack.c.l.b16 %v100
  %v116 = vpack.c.b16 %v113, %v112
  %v117 = vpack.c.b16 %v115, %v114
  %v121 = vsel %vm51, %v96, 0
  %123 = vmatprep.subr.bf16.mxu0 0
  %124 = vmatpush1.bf16.msra.mxu0 %v116
  %125 = vmatprep.subr.bf16.mxu0 0
  %126 = vmatpush1.bf16.msra.mxu0 %v117
  %127 = vmatprep.subr.bf16.mxu0 0
  %128 = vmatpush1.bf16.msra.mxu0 0
  %129 = vmatprep.subr.bf16.mxu0 0
  %130 = vmatpush1.bf16.msra.mxu0 0
  %131 = vmatprep.subr.bf16.mxu0 0
  %132 = vmatpush1.bf16.msra.mxu0 0
  %133 = vmatprep.subr.bf16.mxu0 0
  %134 = vmatpush1.bf16.msra.mxu0 0
  %135 = vmatprep.subr.bf16.mxu0 0
  %136 = vmatpush1.bf16.msra.mxu0 0
  %137 = vmatprep.subr.bf16.mxu0 0
  %138 = vmatpush1.bf16.msra.mxu0 0
  %139 = vmatprep.subr.bf16.mxu0 0
  %140 = vmatpush1.bf16.msra.mxu0 0
  %141 = vmatprep.subr.bf16.mxu0 0
  %142 = vmatpush1.bf16.msra.mxu0 0
  %143 = vmatprep.subr.bf16.mxu0 0
  %144 = vmatpush1.bf16.msra.mxu0 0
  %145 = vmatprep.subr.bf16.mxu0 0
  %146 = vmatpush1.bf16.msra.mxu0 0
  %147 = vmatprep.subr.bf16.mxu0 0
  %148 = vmatpush1.bf16.msra.mxu0 0
  %149 = vmatprep.subr.bf16.mxu0 0
  %150 = vmatpush1.bf16.msra.mxu0 0
  %151 = vmatprep.subr.bf16.mxu0 0
  %152 = vmatpush1.bf16.msra.mxu0 0
  %153 = vmatprep.subr.bf16.mxu0 0
  %154 = vmatpush1.bf16.msra.mxu0 0
  %155 = vmatprep.mubr.bf16.mxu0 0
  %156 = vmatmul.mubr.bf16.gmra.mrb[0].mxu0 %v121
  %v157 = vpop.f32.mrb[0].mxu0
  %v158 = vadd.f32 %v106, %v157
  %v159 = vpop.f32.mrb[0].mxu0
  %v160 = vpop.f32.mrb[0].mxu0
  %v161 = vpop.f32.mrb[0].mxu0
  %162 = vdwg.mxu0
  %v163 = vmax.f32 %v158, 0.0
  %v164 = vpack.c.bf16 %v163, %v163
  %v165 = vld [vmem:[%s5] sm:$0xf]
  %v166 = vld [vmem:[%s5 + $0x4] sm:$0xf]
  %v167 = vld [vmem:[%s5 + $0x8] sm:$0xf]
  %v168 = vld [vmem:[%s5 + $0xc] sm:$0xf]
  %v169 = vld [vmem:[%s6] sm:$0x1]
  %v171 = vlaneseq
  %v172 = vshrl.u32 %v171, 7
  %v173 = vsub.s32 0, %v172
  %v174 = vrot.slane %v169, %v173
  %v180 = vunpack.c.l.b16 %v165
  %v181 = vunpack.c.l.b16 %v166
  %v182 = vunpack.c.l.b16 %v167
  %v183 = vunpack.c.l.b16 %v168
  %v184 = vpack.c.b16 %v181, %v180
  %v185 = vpack.c.b16 %v183, %v182
  %v189 = vsel %vm51, %v164, 0
  %191 = vmatprep.subr.bf16.mxu0 0
  %192 = vmatpush1.bf16.msra.mxu0 %v184
  %193 = vmatprep.subr.bf16.mxu0 0
  %194 = vmatpush1.bf16.msra.mxu0 %v185
  %195 = vmatprep.subr.bf16.mxu0 0
  %196 = vmatpush1.bf16.msra.mxu0 0
  %197 = vmatprep.subr.bf16.mxu0 0
  %198 = vmatpush1.bf16.msra.mxu0 0
  %199 = vmatprep.subr.bf16.mxu0 0
  %200 = vmatpush1.bf16.msra.mxu0 0
  %201 = vmatprep.subr.bf16.mxu0 0
  %202 = vmatpush1.bf16.msra.mxu0 0
  %203 = vmatprep.subr.bf16.mxu0 0
  %204 = vmatpush1.bf16.msra.mxu0 0
  %205 = vmatprep.subr.bf16.mxu0 0
  %206 = vmatpush1.bf16.msra.mxu0 0
  %207 = vmatprep.subr.bf16.mxu0 0
  %208 = vmatpush1.bf16.msra.mxu0 0
  %209 = vmatprep.subr.bf16.mxu0 0
  %210 = vmatpush1.bf16.msra.mxu0 0
  %211 = vmatprep.subr.bf16.mxu0 0
  %212 = vmatpush1.bf16.msra.mxu0 0
  %213 = vmatprep.subr.bf16.mxu0 0
  %214 = vmatpush1.bf16.msra.mxu0 0
  %215 = vmatprep.subr.bf16.mxu0 0
  %216 = vmatpush1.bf16.msra.mxu0 0
  %217 = vmatprep.subr.bf16.mxu0 0
  %218 = vmatpush1.bf16.msra.mxu0 0
  %219 = vmatprep.subr.bf16.mxu0 0
  %220 = vmatpush1.bf16.msra.mxu0 0
  %221 = vmatprep.subr.bf16.mxu0 0
  %222 = vmatpush1.bf16.msra.mxu0 0
  %223 = vmatprep.mubr.bf16.mxu0 0
  %224 = vmatmul.mubr.bf16.gmra.mrb[0].mxu0 %v189
  %v225 = vpop.f32.mrb[0].mxu0
  %v226 = vadd.f32 %v174, %v225
  %v227 = vpop.f32.mrb[0].mxu0
  %v228 = vpop.f32.mrb[0].mxu0
  %v229 = vpop.f32.mrb[0].mxu0
  %230 = vdwg.mxu0
  %231 = vst [vmem:[%s7] sm:$0xff] %v226
  // Predicated region
  $region30: #{resnet_gnn_forward.17} parent=0 // pred_check
    _
  $region31: #{resnet_gnn_forward.17} parent=0 // pred_check_branch
    %233 = sbr.rel (0) target = $region33
  $region32: #{resnet_gnn_forward.17} parent=0 // pred_region
    _
  $region33: #{resnet_gnn_forward.17} parent=0 // pred_fallthru
    _
  // Predicated region
  $region34: #{resnet_gnn_forward.17} parent=0 // pred_check
    _
  $region35: #{resnet_gnn_forward.17} parent=0 // pred_check_branch
    %235 = sbr.rel (0) target = $region37
  $region36: #{resnet_gnn_forward.17} parent=0 // pred_region
    _
  $region37: #{resnet_gnn_forward.17} parent=0 // pred_fallthru
    _

</llo_original>
